<compile_context>
chip_gen: v7x
topology: tpu7x:2x2x1
jax: 0.10.0
libtpu: 0.0.40
codegen_flags: <defaults>
</compile_context>

<pallas_src>
import functools

import jax
import jax.numpy as jnp
from jax import lax
from jax.experimental import pallas as pl
from jax.experimental.pallas import tpu as pltpu


# ----------------------------------------------------------------------------
# HarDBlock topology (identical to the PyTorch get_link logic)
# ----------------------------------------------------------------------------
def get_link(layer, base_ch, growth_rate, grmul):
    if layer == 0:
        return base_ch, 0, []
    out_channels = growth_rate
    link = []
    for i in range(10):
        dv = 2 ** i
        if layer % dv == 0:
            k = layer - dv
            link.append(k)
            if i > 0:
                out_channels *= grmul
    out_channels = int(int(out_channels + 1) / 2) * 2
    in_channels = 0
    for i in link:
        ch, _, _ = get_link(i, base_ch, growth_rate, grmul)
        in_channels += ch
    return out_channels, in_channels, link


def _round_up(x, m):
    return ((x + m - 1) // m) * m


def _pick_band(h, width):
    """Smallest row-band dividing H whose output chunk band*W is a multiple of 128
    (lane-dense stores, more grid steps per core); falls back to the whole image."""
    for b in range(1, h + 1):
        if h % b == 0 and (b * width) % 128 == 0:
            return b
    return h


def _pick_rows(rows, lanes, itemsize=2, target_bytes=4 << 20):
    """Row tile for the mem-bound affine+ReLU pass: whole slab if it fits ~4 MiB,
    else the largest multiple-of-8 divisor that fits."""
    if rows * lanes * itemsize <= target_bytes:
        return rows
    cands = [t for t in range(8, rows, 8)
             if rows % t == 0 and t * lanes * itemsize <= target_bytes]
    return max(cands) if cands else rows


# ----------------------------------------------------------------------------
# Kernel 1: conv3x3 (single K=9*Cin_p MXU matmul per row-band) + BN partials
# ----------------------------------------------------------------------------
def _conv_stats_kernel(width, band, x_ref, w_ref, y_ref, stats_ref):
    # x_ref:     (1, 1, Cin_p, (band+2)*W + 2)  bf16 band slab (h-padded, 1 guard col each side)
    # w_ref:     (Cout, 9*Cin_p)                bf16 weights, col = (ky*3+kx)*Cin_p + c
    # y_ref:     (1, Cout, band*W)              bf16 lane-dense conv output chunk
    # stats_ref: (1, 1, Cout, 2)                f32  [sum, sum_of_squares] for this band
    bw_out = band * width
    xb = x_ref[0, 0]                                            # (Cin_p, bw_ext) bf16

    # Column masks implement the width padding (left/right taps read junk there).
    col = lax.broadcasted_iota(jnp.int32, (1, bw_out), 1) % width
    not_left = col != 0            # invalid positions for kx == 0 (input col x-1)
    not_right = col != width - 1   # invalid positions for kx == 2 (input col x+1)

    # tap(ky,kx)[c, p] = slab[c, p + ky*W + kx] (flat), p = y_local*W + x.
    taps = []
    for ky in range(3):
        for kx in range(3):
            start = ky * width + kx
            tap = xb[:, start:start + bw_out]
            if kx == 0:
                tap = jnp.where(not_left, tap, jnp.zeros_like(tap))
            elif kx == 2:
                tap = jnp.where(not_right, tap, jnp.zeros_like(tap))
            taps.append(tap)
    patches = jnp.concatenate(taps, axis=0)                     # (9*Cin_p, band*W) bf16

    # One MXU matmul (bf16 x bf16 -> f32); result is already in the stored layout.
    acc = jnp.dot(w_ref[...], patches, preferred_element_type=jnp.float32)

    # Per-band partial statistics for training-mode BatchNorm (reduced globally in glue).
    stats_ref[0, 0, :, :] = jnp.concatenate(
        [jnp.sum(acc, axis=1, keepdims=True),
         jnp.sum(acc * acc, axis=1, keepdims=True)], axis=1)    # (Cout, 2) f32

    y_ref[0, :, :] = acc.astype(y_ref.dtype)                    # lane-dense bf16 store


# ----------------------------------------------------------------------------
# Kernel 2: BN affine (global batch stats folded into scale/bias) + ReLU
# ----------------------------------------------------------------------------
def _bn_relu_kernel(y_ref, scale_ref, bias_ref, o_ref):
    # y_ref/o_ref: (TR, H*W) bf16 lane-dense rows; scale/bias: (TR, 1) f32 per row.
    y = y_ref[...].astype(jnp.float32)
    o_ref[...] = jnp.maximum(y * scale_ref[...] + bias_ref[...], 0.0).astype(o_ref.dtype)


# ----------------------------------------------------------------------------
# One ConvLayer (conv3x3 + BN(batch stats) + ReLU), NCHW bf16 in / NCHW bf16 out
# ----------------------------------------------------------------------------
def conv_bn_relu(x, w2, gamma, beta, *, eps=1e-5):
    n, cin, h, width = x.shape
    cout = w2.shape[0]
    cin_p = _round_up(cin, 8)
    assert w2.shape == (cout, 9 * cin_p)

    band = _pick_band(h, width)
    n_bands = h // band
    bw_out = band * width
    bw_ext = (band + 2) * width + 2
    hw = h * width

    # Glue (pure data movement): zero-pad channels to a multiple of 8, pad H by 1,
    # gather overlapping row-bands (halo rows), flatten spatial, add 1 guard column
    # on each side so every tap is a plain in-bounds static slice.
    xp = jnp.pad(x, ((0, 0), (0, cin_p - cin), (1, 1), (0, 0)))           # (n, cin_p, h+2, W)
    bands = [xp[:, :, b * band:b * band + band + 2, :] for b in range(n_bands)]
    xb = jnp.stack(bands, axis=1).reshape(n, n_bands, cin_p, (band + 2) * width)
    xb = jnp.pad(xb, ((0, 0), (0, 0), (0, 0), (1, 1)))                    # (n, nb, cin_p, bw_ext)

    # VMEM budget from actual (padded) block sizes; capped well below v7x's 64 MiB.
    x_blk = _round_up(cin_p, 16) * _round_up(bw_ext, 128) * 2
    w_blk = _round_up(cout, 16) * _round_up(9 * cin_p, 128) * 2
    y_blk = _round_up(cout, 16) * bw_out * 2
    st_blk = 8 * 128 * 4
    patches_blk = _round_up(9 * cin_p, 16) * bw_out * 2
    acc_blk = _round_up(cout, 8) * bw_out * 4
    est = 2 * (x_blk + w_blk + y_blk + st_blk) + patches_blk + acc_blk + (2 << 20)
    vmem_limit = int(min(48 << 20, max(16 << 20, est)))

    cost = pl.CostEstimate(
        flops=2 * n * hw * 9 * cin_p * cout,
        transcendentals=0,
        bytes_accessed=xb.size * 2 + w2.size * 2 + n * cout * hw * 2
        + n * n_bands * cout * 2 * 4,
    )

    kernel = functools.partial(_conv_stats_kernel, width, band)

    # Pass 1: conv + per-band BN partials, grid over (image, row-band), both parallel.
    y2d, stats = pl.pallas_call(
        kernel,
        out_shape=(
            jax.ShapeDtypeStruct((n, cout, hw), jnp.bfloat16),
            jax.ShapeDtypeStruct((n, n_bands, cout, 2), jnp.float32),
        ),
        grid=(n, n_bands),
        in_specs=[
            pl.BlockSpec((1, 1, cin_p, bw_ext), lambda i, b: (i, b, 0, 0)),
            pl.BlockSpec((cout, 9 * cin_p), lambda i, b: (0, 0)),
        ],
        out_specs=(
            pl.BlockSpec((1, cout, bw_out), lambda i, b: (i, 0, b)),
            pl.BlockSpec((1, 1, cout, 2), lambda i, b: (i, b, 0, 0)),
        ),
        compiler_params=pltpu.CompilerParams(
            dimension_semantics=("parallel", "parallel"),
            vmem_limit_bytes=vmem_limit,
        ),
        cost_estimate=cost,
    )(xb, w2)

    # Tiny O(Cout) glue: fold GLOBAL batch statistics (biased variance) into scale/bias.
    count = float(n * hw)
    total = jnp.sum(stats, axis=(0, 1))            # (Cout, 2)
    mean = total[:, 0] / count
    ex2 = total[:, 1] / count
    var = jnp.maximum(ex2 - mean * mean, 0.0)      # guard f32 cancellation
    inv = lax.rsqrt(var + eps)
    scale = (gamma * inv).astype(jnp.float32)                       # (Cout,)
    bias = (beta - mean * gamma * inv).astype(jnp.float32)          # (Cout,)

    # Pass 2: lane-dense affine + ReLU over (N*Cout, H*W) rows, large tiles.
    rows = n * cout
    y_flat = y2d.reshape(rows, hw)
    scale_r = jnp.tile(scale, n).reshape(rows, 1)
    bias_r = jnp.tile(bias, n).reshape(rows, 1)
    tr = _pick_rows(rows, hw)
    y_act = pl.pallas_call(
        _bn_relu_kernel,
        out_shape=jax.ShapeDtypeStruct((rows, hw), jnp.bfloat16),
        grid=(rows // tr,),
        in_specs=[
            pl.BlockSpec((tr, hw), lambda i: (i, 0)),
            pl.BlockSpec((tr, 1), lambda i: (i, 0)),
            pl.BlockSpec((tr, 1), lambda i: (i, 0)),
        ],
        out_specs=pl.BlockSpec((tr, hw), lambda i: (i, 0)),
        compiler_params=pltpu.CompilerParams(dimension_semantics=("parallel",)),
    )(y_flat, scale_r, bias_r)

    return y_act.reshape(n, cout, h, width)


# ----------------------------------------------------------------------------
# HarDBlock parameters + forward
# ----------------------------------------------------------------------------
def make_hardblock_params(key, in_channels, growth_rate, grmul, n_layers):
    links, layer_shapes = [], []
    block_out_channels = 0
    for i in range(n_layers):
        outch, inch, link = get_link(i + 1, in_channels, growth_rate, grmul)
        links.append(link)
        layer_shapes.append((inch, outch))
        if i % 2 == 0 or i == n_layers - 1:
            block_out_channels += outch

    params = []
    for (inch, outch) in layer_shapes:
        key, kw, kg, kb = jax.random.split(key, 4)
        cin_p = _round_up(inch, 8)
        # PyTorch conv weight layout: (Cout, Cin, 3, 3)
        w = jax.random.normal(kw, (outch, inch, 3, 3), jnp.float32) * 0.1
        # -> (Cout, ky, kx, Cin_p) -> (Cout, 9*Cin_p), zero rows for channel padding.
        w_t = jnp.transpose(w, (0, 2, 3, 1))
        w_t = jnp.pad(w_t, ((0, 0), (0, 0), (0, 0), (0, cin_p - inch)))
        w2 = w_t.reshape(outch, 9 * cin_p).astype(jnp.bfloat16)
        gamma = 1.0 + 0.1 * jax.random.normal(kg, (outch,), jnp.float32)
        beta = 0.1 * jax.random.normal(kb, (outch,), jnp.float32)
        params.append((w2, gamma, beta))
    return params, links, block_out_channels


def hardblock_forward(x_nchw, params, links, keep_base=False):
    # NCHW in / NCHW out (PyTorch convention); channels-first bf16 inside.
    # `links` must be static Python ints.
    x = x_nchw.astype(jnp.bfloat16)
    layers_ = [x]
    for layer, (w2, gamma, beta) in enumerate(params):
        link = links[layer]
        tin = [layers_[i] for i in link]
        xin = jnp.concatenate(tin, axis=1) if len(tin) > 1 else tin[0]
        out = conv_bn_relu(xin, w2, gamma, beta)
        layers_.append(out)
    t = len(layers_)
    out_ = []
    for i in range(t):
        if (i == 0 and keep_base) or i == t - 1 or (i % 2 == 1):
            out_.append(layers_[i])
    # TODO(synk): optional further fusion of BN+ReLU into consumer conv kernels
    # (review item 9) is not implemented; pass 2 remains a separate lane-dense kernel.
    return jnp.concatenate(out_, axis=1).astype(jnp.float32)


# ----------------------------------------------------------------------------
if __name__ == "__main__":
    # Small HarDBlock: in_channels=8, growth_rate=4, grmul=1.7, n_layers=4
    N, C, H, W = 2, 8, 16, 16
    growth_rate, grmul, n_layers = 4, 1.7, 4

    key = jax.random.PRNGKey(0)
    kx, kp = jax.random.split(key)
    x = jax.random.normal(kx, (N, C, H, W), jnp.float32)

    params, links, out_ch = make_hardblock_params(kp, C, growth_rate, grmul, n_layers)

    # links is baked in as a static Python constant.
    fwd = jax.jit(lambda xx, pp: hardblock_forward(xx, pp, links, keep_base=False))
    y = jax.block_until_ready(fwd(x, params))

    assert y.shape == (N, out_ch, H, W), (y.shape, out_ch)
    assert bool(jnp.all(jnp.isfinite(y)))
    print("KERNEL_OK")
</pallas_src>

<mosaic_0001>
module attributes {stable_mosaic.version = 11 : i64} {
  func.func @_bn_relu_kernel(%arg0: i32, %arg1: memref<8x256xbf16, #tpu.memory_space<vmem>>, %arg2: memref<8x1xf32, #tpu.memory_space<vmem>>, %arg3: memref<8x1xf32, #tpu.memory_space<vmem>>, %arg4: memref<8x256xbf16, #tpu.memory_space<vmem>>) attributes {dimension_semantics = [#tpu.dimension_semantics<parallel>], iteration_bounds = array<i64: 1>, scalar_prefetch = 0 : i64, scratch_operands = 0 : i64, tpu.core_type = #tpu.core_type<tc>, window_params = [{transform_indices = @transform_0, window_bounds = array<i64: 8, 256>}, {transform_indices = @transform_1, window_bounds = array<i64: 8, 1>}, {transform_indices = @transform_2, window_bounds = array<i64: 8, 1>}, {transform_indices = @transform_3, window_bounds = array<i64: 8, 256>}]} {
    %c0 = arith.constant 0 : index
    %c0_0 = arith.constant 0 : index
    %0 = vector.load %arg1[%c0, %c0_0] : memref<8x256xbf16, #tpu.memory_space<vmem>>, vector<8x256xbf16>
    %1 = arith.extf %0 : vector<8x256xbf16> to vector<8x256xf32>
    %c0_1 = arith.constant 0 : index
    %c0_2 = arith.constant 0 : index
    %2 = vector.load %arg2[%c0_1, %c0_2] : memref<8x1xf32, #tpu.memory_space<vmem>>, vector<8x1xf32>
    %3 = vector.broadcast %2 : vector<8x1xf32> to vector<8x256xf32>
    %4 = arith.mulf %1, %3 : vector<8x256xf32>
    %c0_3 = arith.constant 0 : index
    %c0_4 = arith.constant 0 : index
    %5 = vector.load %arg3[%c0_3, %c0_4] : memref<8x1xf32, #tpu.memory_space<vmem>>, vector<8x1xf32>
    %6 = vector.broadcast %5 : vector<8x1xf32> to vector<8x256xf32>
    %7 = arith.addf %4, %6 : vector<8x256xf32>
    %cst = arith.constant 0.000000e+00 : f32
    %8 = vector.broadcast %cst : f32 to vector<8x256xf32>
    %9 = arith.maximumf %7, %8 : vector<8x256xf32>
    %10 = arith.truncf %9 : vector<8x256xf32> to vector<8x256xbf16>
    %c0_5 = arith.constant 0 : index
    %c0_6 = arith.constant 0 : index
    %11 = vector.load %arg4[%c0_5, %c0_6] : memref<8x256xbf16, #tpu.memory_space<vmem>>, vector<8x256xbf16>
    tpu.vector_store %arg4[%c0_5, %c0_6], %10 {strides = array<i32>} : memref<8x256xbf16, #tpu.memory_space<vmem>>, vector<8x256xbf16>,
    return
  }
  func.func @transform_0(%arg0: i32) -> (i32, i32) {
    %c0_i32 = arith.constant 0 : i32
    %c0_i32_0 = arith.constant 0 : i32
    return %arg0, %c0_i32 : i32, i32
  }
  func.func @transform_1(%arg0: i32) -> (i32, i32) {
    %c0_i32 = arith.constant 0 : i32
    %c0_i32_0 = arith.constant 0 : i32
    return %arg0, %c0_i32 : i32, i32
  }
  func.func @transform_2(%arg0: i32) -> (i32, i32) {
    %c0_i32 = arith.constant 0 : i32
    %c0_i32_0 = arith.constant 0 : i32
    return %arg0, %c0_i32 : i32, i32
  }
  func.func @transform_3(%arg0: i32) -> (i32, i32) {
    %c0_i32 = arith.constant 0 : i32
    %c0_i32_0 = arith.constant 0 : i32
    return %arg0, %c0_i32 : i32, i32
  }
}

module attributes {stable_mosaic.version = 11 : i64} {
  func.func @_conv_stats_kernel(%arg0: i32, %arg1: i32, %arg2: memref<1x1x8x162xbf16, #tpu.memory_space<vmem>>, %arg3: memref<4x72xbf16, #tpu.memory_space<vmem>>, %arg4: memref<1x4x128xbf16, #tpu.memory_space<vmem>>, %arg5: memref<1x1x4x2xf32, #tpu.memory_space<vmem>>) attributes {dimension_semantics = [#tpu.dimension_semantics<parallel>, #tpu.dimension_semantics<parallel>], iteration_bounds = array<i64: 2, 2>, scalar_prefetch = 0 : i64, scratch_operands = 0 : i64, tpu.core_type = #tpu.core_type<tc>, window_params = [{transform_indices = @transform_0, window_bounds = array<i64: 1, 1, 8, 162>}, {pipeline_mode = #tpu.pipeline_mode<synchronous>, transform_indices = @transform_1, window_bounds = array<i64: 4, 72>}, {transform_indices = @transform_2, window_bounds = array<i64: 1, 4, 128>}, {transform_indices = @transform_3, window_bounds = array<i64: 1, 1, 4, 2>}]} {
    %c0 = arith.constant 0 : index
    %c0_0 = arith.constant 0 : index
    %c0_1 = arith.constant 0 : index
    %c0_2 = arith.constant 0 : index
    %0 = vector.load %arg2[%c0, %c0_0, %c0_1, %c0_2] : memref<1x1x8x162xbf16, #tpu.memory_space<vmem>>, vector<1x1x8x162xbf16>
    %1 = vector.shape_cast %0 : vector<1x1x8x162xbf16> to vector<8x162xbf16>
    %2 = tpu.iota {dimensions = array<i32: 1>} : vector<1x128xi32>
    %c16_i32 = arith.constant 16 : i32
    %c0_i32 = arith.constant 0 : i32
    %3 = arith.cmpi eq, %c16_i32, %c0_i32 : i32
    %c1_i32 = arith.constant 1 : i32
    %4 = arith.select %3, %c1_i32, %c16_i32 : i32
    %5 = vector.broadcast %4 : i32 to vector<1x128xi32>
    %6 = arith.remsi %2, %5 : vector<1x128xi32>
    %c0_i32_3 = arith.constant 0 : i32
    %7 = vector.broadcast %c0_i32_3 : i32 to vector<1x128xi32>
    %8 = arith.cmpi ne, %6, %7 : vector<1x128xi32>
    %c0_i32_4 = arith.constant 0 : i32
    %9 = vector.broadcast %c0_i32_4 : i32 to vector<1x128xi32>
    %10 = arith.cmpi slt, %6, %9 : vector<1x128xi32>
    %c0_i32_5 = arith.constant 0 : i32
    %11 = arith.cmpi slt, %4, %c0_i32_5 : i32
    %12 = vector.broadcast %11 : i1 to vector<1x128xi1>
    %13 = vector.broadcast %12 : vector<1x128xi1> to vector<1x128xi1>
    %14 = arith.xori %10, %13 : vector<1x128xi1>
    %15 = arith.andi %14, %8 : vector<1x128xi1>
    %16 = vector.broadcast %4 : i32 to vector<1x128xi32>
    %17 = arith.addi %6, %16 : vector<1x128xi32>
    %18 = arith.select %15, %17, %6 : vector<1x128xi1>, vector<1x128xi32>
    %c0_i32_6 = arith.constant 0 : i32
    %19 = vector.broadcast %c0_i32_6 : i32 to vector<1x128xi32>
    %20 = arith.cmpi ne, %18, %19 : vector<1x128xi32>
    %c15_i32 = arith.constant 15 : i32
    %21 = vector.broadcast %c15_i32 : i32 to vector<1x128xi32>
    %22 = arith.cmpi ne, %18, %21 : vector<1x128xi32>
    %23 = vector.extract_strided_slice %1 {offsets = [0, 0], sizes = [8, 128], strides = [1, 1]} : vector<8x162xbf16> to vector<8x128xbf16>
    %cst = arith.constant 0.000000e+00 : bf16
    %24 = vector.broadcast %cst : bf16 to vector<8x128xbf16>
    %25 = vector.shape_cast %20 : vector<1x128xi1> to vector<1x128xi1>
    %26 = vector.broadcast %25 : vector<1x128xi1> to vector<8x128xi1>
    %27 = arith.select %26, %23, %24 : vector<8x128xi1>, vector<8x128xbf16>
    %28 = vector.extract_strided_slice %1 {offsets = [0, 1], sizes = [8, 128], strides = [1, 1]} : vector<8x162xbf16> to vector<8x128xbf16>
    %29 = vector.extract_strided_slice %1 {offsets = [0, 2], sizes = [8, 128], strides = [1, 1]} : vector<8x162xbf16> to vector<8x128xbf16>
    %cst_7 = arith.constant 0.000000e+00 : bf16
    %30 = vector.broadcast %cst_7 : bf16 to vector<8x128xbf16>
    %31 = vector.shape_cast %22 : vector<1x128xi1> to vector<1x128xi1>
    %32 = vector.broadcast %31 : vector<1x128xi1> to vector<8x128xi1>
    %33 = arith.select %32, %29, %30 : vector<8x128xi1>, vector<8x128xbf16>
    %34 = vector.extract_strided_slice %1 {offsets = [0, 16], sizes = [8, 128], strides = [1, 1]} : vector<8x162xbf16> to vector<8x128xbf16>
    %cst_8 = arith.constant 0.000000e+00 : bf16
    %35 = vector.broadcast %cst_8 : bf16 to vector<8x128xbf16>
    %36 = vector.shape_cast %20 : vector<1x128xi1> to vector<1x128xi1>
    %37 = vector.broadcast %36 : vector<1x128xi1> to vector<8x128xi1>
    %38 = arith.select %37, %34, %35 : vector<8x128xi1>, vector<8x128xbf16>
    %39 = vector.extract_strided_slice %1 {offsets = [0, 17], sizes = [8, 128], strides = [1, 1]} : vector<8x162xbf16> to vector<8x128xbf16>
    %40 = vector.extract_strided_slice %1 {offsets = [0, 18], sizes = [8, 128], strides = [1, 1]} : vector<8x162xbf16> to vector<8x128xbf16>
    %cst_9 = arith.constant 0.000000e+00 : bf16
    %41 = vector.broadcast %cst_9 : bf16 to vector<8x128xbf16>
    %42 = vector.shape_cast %22 : vector<1x128xi1> to vector<1x128xi1>
    %43 = vector.broadcast %42 : vector<1x128xi1> to vector<8x128xi1>
    %44 = arith.select %43, %40, %41 : vector<8x128xi1>, vector<8x128xbf16>
    %45 = vector.extract_strided_slice %1 {offsets = [0, 32], sizes = [8, 128], strides = [1, 1]} : vector<8x162xbf16> to vector<8x128xbf16>
    %cst_10 = arith.constant 0.000000e+00 : bf16
    %46 = vector.broadcast %cst_10 : bf16 to vector<8x128xbf16>
    %47 = vector.shape_cast %20 : vector<1x128xi1> to vector<1x128xi1>
    %48 = vector.broadcast %47 : vector<1x128xi1> to vector<8x128xi1>
    %49 = arith.select %48, %45, %46 : vector<8x128xi1>, vector<8x128xbf16>
    %50 = vector.extract_strided_slice %1 {offsets = [0, 33], sizes = [8, 128], strides = [1, 1]} : vector<8x162xbf16> to vector<8x128xbf16>
    %51 = vector.extract_strided_slice %1 {offsets = [0, 34], sizes = [8, 128], strides = [1, 1]} : vector<8x162xbf16> to vector<8x128xbf16>
    %cst_11 = arith.constant 0.000000e+00 : bf16
    %52 = vector.broadcast %cst_11 : bf16 to vector<8x128xbf16>
    %53 = vector.shape_cast %22 : vector<1x128xi1> to vector<1x128xi1>
    %54 = vector.broadcast %53 : vector<1x128xi1> to vector<8x128xi1>
    %55 = arith.select %54, %51, %52 : vector<8x128xi1>, vector<8x128xbf16>
    %56 = tpu.concatenate %27, %28, %33, %38, %39, %44, %49, %50, %55 in 0 : vector<8x128xbf16>, vector<8x128xbf16>, vector<8x128xbf16>, vector<8x128xbf16>, vector<8x128xbf16>, vector<8x128xbf16>, vector<8x128xbf16>, vector<8x128xbf16>, vector<8x128xbf16> -> vector<72x128xbf16>
    %c0_12 = arith.constant 0 : index
    %c0_13 = arith.constant 0 : index
    %57 = vector.load %arg3[%c0_12, %c0_13] : memref<4x72xbf16, #tpu.memory_space<vmem>>, vector<4x72xbf16>
    %cst_14 = arith.constant dense<0.000000e+00> : vector<4x128xf32>
    %58 = tpu.matmul %57, %56, %cst_14 {dimension_numbers = #tpu.dot_dimension_numbers<[1], [0], [0], [1], [0, 0, 1, 1], [], []>} : vector<4x72xbf16>, vector<72x128xbf16>, vector<4x128xf32> -> vector<4x128xf32>
    %cst_15 = arith.constant dense<0.000000e+00> : vector<4xf32>
    %59 = vector.multi_reduction <add>, %58, %cst_15 [1] : vector<4x128xf32> to vector<4xf32>
    %60 = vector.shape_cast %59 : vector<4xf32> to vector<4x1xf32>
    %61 = arith.mulf %58, %58 : vector<4x128xf32>
    %cst_16 = arith.constant dense<0.000000e+00> : vector<4xf32>
    %62 = vector.multi_reduction <add>, %61, %cst_16 [1] : vector<4x128xf32> to vector<4xf32>
    %63 = vector.shape_cast %62 : vector<4xf32> to vector<4x1xf32>
    %64 = tpu.concatenate %60, %63 in 1 : vector<4x1xf32>, vector<4x1xf32> -> vector<4x2xf32>
    %c0_17 = arith.constant 0 : index
    %c0_18 = arith.constant 0 : index
    %c0_19 = arith.constant 0 : index
    %c0_20 = arith.constant 0 : index
    %65 = vector.load %arg5[%c0_17, %c0_18, %c0_19, %c0_20] : memref<1x1x4x2xf32, #tpu.memory_space<vmem>>, vector<1x1x4x2xf32>
    %66 = vector.shape_cast %65 : vector<1x1x4x2xf32> to vector<4x2xf32>
    %67 = vector.shape_cast %64 : vector<4x2xf32> to vector<1x1x4x2xf32>
    tpu.vector_store %arg5[%c0_17, %c0_18, %c0_19, %c0_20], %67 {strides = array<i32>} : memref<1x1x4x2xf32, #tpu.memory_space<vmem>>, vector<1x1x4x2xf32>,
    %68 = arith.truncf %58 : vector<4x128xf32> to vector<4x128xbf16>
    %c0_21 = arith.constant 0 : index
    %c0_22 = arith.constant 0 : index
    %c0_23 = arith.constant 0 : index
    %69 = vector.load %arg4[%c0_21, %c0_22, %c0_23] : memref<1x4x128xbf16, #tpu.memory_space<vmem>>, vector<1x4x128xbf16>
    %70 = vector.shape_cast %69 : vector<1x4x128xbf16> to vector<4x128xbf16>
    %71 = vector.shape_cast %68 : vector<4x128xbf16> to vector<1x4x128xbf16>
    tpu.vector_store %arg4[%c0_21, %c0_22, %c0_23], %71 {strides = array<i32>} : memref<1x4x128xbf16, #tpu.memory_space<vmem>>, vector<1x4x128xbf16>,
    return
  }
  func.func @transform_0(%arg0: i32, %arg1: i32) -> (i32, i32, i32, i32) {
    %c0_i32 = arith.constant 0 : i32
    %c0_i32_0 = arith.constant 0 : i32
    %c0_i32_1 = arith.constant 0 : i32
    return %arg0, %arg1, %c0_i32, %c0_i32_0 : i32, i32, i32, i32
  }
  func.func @transform_1(%arg0: i32, %arg1: i32) -> (i32, i32) {
    %c0_i32 = arith.constant 0 : i32
    %c0_i32_0 = arith.constant 0 : i32
    %c0_i32_1 = arith.constant 0 : i32
    return %c0_i32, %c0_i32_0 : i32, i32
  }
  func.func @transform_2(%arg0: i32, %arg1: i32) -> (i32, i32, i32) {
    %c0_i32 = arith.constant 0 : i32
    %c0_i32_0 = arith.constant 0 : i32
    return %arg0, %c0_i32, %arg1 : i32, i32, i32
  }
  func.func @transform_3(%arg0: i32, %arg1: i32) -> (i32, i32, i32, i32) {
    %c0_i32 = arith.constant 0 : i32
    %c0_i32_0 = arith.constant 0 : i32
    %c0_i32_1 = arith.constant 0 : i32
    return %arg0, %arg1, %c0_i32, %c0_i32_0 : i32, i32, i32, i32
  }
}

module attributes {stable_mosaic.version = 11 : i64} {
  func.func @_conv_stats_kernel(%arg0: i32, %arg1: i32, %arg2: memref<1x1x16x162xbf16, #tpu.memory_space<vmem>>, %arg3: memref<6x144xbf16, #tpu.memory_space<vmem>>, %arg4: memref<1x6x128xbf16, #tpu.memory_space<vmem>>, %arg5: memref<1x1x6x2xf32, #tpu.memory_space<vmem>>) attributes {dimension_semantics = [#tpu.dimension_semantics<parallel>, #tpu.dimension_semantics<parallel>], iteration_bounds = array<i64: 2, 2>, scalar_prefetch = 0 : i64, scratch_operands = 0 : i64, tpu.core_type = #tpu.core_type<tc>, window_params = [{transform_indices = @transform_0, window_bounds = array<i64: 1, 1, 16, 162>}, {pipeline_mode = #tpu.pipeline_mode<synchronous>, transform_indices = @transform_1, window_bounds = array<i64: 6, 144>}, {transform_indices = @transform_2, window_bounds = array<i64: 1, 6, 128>}, {transform_indices = @transform_3, window_bounds = array<i64: 1, 1, 6, 2>}]} {
    %c0 = arith.constant 0 : index
    %c0_0 = arith.constant 0 : index
    %c0_1 = arith.constant 0 : index
    %c0_2 = arith.constant 0 : index
    %0 = vector.load %arg2[%c0, %c0_0, %c0_1, %c0_2] : memref<1x1x16x162xbf16, #tpu.memory_space<vmem>>, vector<1x1x16x162xbf16>
    %1 = vector.shape_cast %0 : vector<1x1x16x162xbf16> to vector<16x162xbf16>
    %2 = tpu.iota {dimensions = array<i32: 1>} : vector<1x128xi32>
    %c16_i32 = arith.constant 16 : i32
    %c0_i32 = arith.constant 0 : i32
    %3 = arith.cmpi eq, %c16_i32, %c0_i32 : i32
    %c1_i32 = arith.constant 1 : i32
    %4 = arith.select %3, %c1_i32, %c16_i32 : i32
    %5 = vector.broadcast %4 : i32 to vector<1x128xi32>
    %6 = arith.remsi %2, %5 : vector<1x128xi32>
    %c0_i32_3 = arith.constant 0 : i32
    %7 = vector.broadcast %c0_i32_3 : i32 to vector<1x128xi32>
    %8 = arith.cmpi ne, %6, %7 : vector<1x128xi32>
    %c0_i32_4 = arith.constant 0 : i32
    %9 = vector.broadcast %c0_i32_4 : i32 to vector<1x128xi32>
    %10 = arith.cmpi slt, %6, %9 : vector<1x128xi32>
    %c0_i32_5 = arith.constant 0 : i32
    %11 = arith.cmpi slt, %4, %c0_i32_5 : i32
    %12 = vector.broadcast %11 : i1 to vector<1x128xi1>
    %13 = vector.broadcast %12 : vector<1x128xi1> to vector<1x128xi1>
    %14 = arith.xori %10, %13 : vector<1x128xi1>
    %15 = arith.andi %14, %8 : vector<1x128xi1>
    %16 = vector.broadcast %4 : i32 to vector<1x128xi32>
    %17 = arith.addi %6, %16 : vector<1x128xi32>
    %18 = arith.select %15, %17, %6 : vector<1x128xi1>, vector<1x128xi32>
    %c0_i32_6 = arith.constant 0 : i32
    %19 = vector.broadcast %c0_i32_6 : i32 to vector<1x128xi32>
    %20 = arith.cmpi ne, %18, %19 : vector<1x128xi32>
    %c15_i32 = arith.constant 15 : i32
    %21 = vector.broadcast %c15_i32 : i32 to vector<1x128xi32>
    %22 = arith.cmpi ne, %18, %21 : vector<1x128xi32>
    %23 = vector.extract_strided_slice %1 {offsets = [0, 0], sizes = [16, 128], strides = [1, 1]} : vector<16x162xbf16> to vector<16x128xbf16>
    %cst = arith.constant 0.000000e+00 : bf16
    %24 = vector.broadcast %cst : bf16 to vector<16x128xbf16>
    %25 = vector.shape_cast %20 : vector<1x128xi1> to vector<1x128xi1>
    %26 = vector.broadcast %25 : vector<1x128xi1> to vector<16x128xi1>
    %27 = arith.select %26, %23, %24 : vector<16x128xi1>, vector<16x128xbf16>
    %28 = vector.extract_strided_slice %1 {offsets = [0, 1], sizes = [16, 128], strides = [1, 1]} : vector<16x162xbf16> to vector<16x128xbf16>
    %29 = vector.extract_strided_slice %1 {offsets = [0, 2], sizes = [16, 128], strides = [1, 1]} : vector<16x162xbf16> to vector<16x128xbf16>
    %cst_7 = arith.constant 0.000000e+00 : bf16
    %30 = vector.broadcast %cst_7 : bf16 to vector<16x128xbf16>
    %31 = vector.shape_cast %22 : vector<1x128xi1> to vector<1x128xi1>
    %32 = vector.broadcast %31 : vector<1x128xi1> to vector<16x128xi1>
    %33 = arith.select %32, %29, %30 : vector<16x128xi1>, vector<16x128xbf16>
    %34 = vector.extract_strided_slice %1 {offsets = [0, 16], sizes = [16, 128], strides = [1, 1]} : vector<16x162xbf16> to vector<16x128xbf16>
    %cst_8 = arith.constant 0.000000e+00 : bf16
    %35 = vector.broadcast %cst_8 : bf16 to vector<16x128xbf16>
    %36 = vector.shape_cast %20 : vector<1x128xi1> to vector<1x128xi1>
    %37 = vector.broadcast %36 : vector<1x128xi1> to vector<16x128xi1>
    %38 = arith.select %37, %34, %35 : vector<16x128xi1>, vector<16x128xbf16>
    %39 = vector.extract_strided_slice %1 {offsets = [0, 17], sizes = [16, 128], strides = [1, 1]} : vector<16x162xbf16> to vector<16x128xbf16>
    %40 = vector.extract_strided_slice %1 {offsets = [0, 18], sizes = [16, 128], strides = [1, 1]} : vector<16x162xbf16> to vector<16x128xbf16>
    %cst_9 = arith.constant 0.000000e+00 : bf16
    %41 = vector.broadcast %cst_9 : bf16 to vector<16x128xbf16>
    %42 = vector.shape_cast %22 : vector<1x128xi1> to vector<1x128xi1>
    %43 = vector.broadcast %42 : vector<1x128xi1> to vector<16x128xi1>
    %44 = arith.select %43, %40, %41 : vector<16x128xi1>, vector<16x128xbf16>
    %45 = vector.extract_strided_slice %1 {offsets = [0, 32], sizes = [16, 128], strides = [1, 1]} : vector<16x162xbf16> to vector<16x128xbf16>
    %cst_10 = arith.constant 0.000000e+00 : bf16
    %46 = vector.broadcast %cst_10 : bf16 to vector<16x128xbf16>
    %47 = vector.shape_cast %20 : vector<1x128xi1> to vector<1x128xi1>
    %48 = vector.broadcast %47 : vector<1x128xi1> to vector<16x128xi1>
    %49 = arith.select %48, %45, %46 : vector<16x128xi1>, vector<16x128xbf16>
    %50 = vector.extract_strided_slice %1 {offsets = [0, 33], sizes = [16, 128], strides = [1, 1]} : vector<16x162xbf16> to vector<16x128xbf16>
    %51 = vector.extract_strided_slice %1 {offsets = [0, 34], sizes = [16, 128], strides = [1, 1]} : vector<16x162xbf16> to vector<16x128xbf16>
    %cst_11 = arith.constant 0.000000e+00 : bf16
    %52 = vector.broadcast %cst_11 : bf16 to vector<16x128xbf16>
    %53 = vector.shape_cast %22 : vector<1x128xi1> to vector<1x128xi1>
    %54 = vector.broadcast %53 : vector<1x128xi1> to vector<16x128xi1>
    %55 = arith.select %54, %51, %52 : vector<16x128xi1>, vector<16x128xbf16>
    %56 = tpu.concatenate %27, %28, %33, %38, %39, %44, %49, %50, %55 in 0 : vector<16x128xbf16>, vector<16x128xbf16>, vector<16x128xbf16>, vector<16x128xbf16>, vector<16x128xbf16>, vector<16x128xbf16>, vector<16x128xbf16>, vector<16x128xbf16>, vector<16x128xbf16> -> vector<144x128xbf16>
    %c0_12 = arith.constant 0 : index
    %c0_13 = arith.constant 0 : index
    %57 = vector.load %arg3[%c0_12, %c0_13] : memref<6x144xbf16, #tpu.memory_space<vmem>>, vector<6x144xbf16>
    %cst_14 = arith.constant dense<0.000000e+00> : vector<6x128xf32>
    %58 = tpu.matmul %57, %56, %cst_14 {dimension_numbers = #tpu.dot_dimension_numbers<[1], [0], [0], [1], [0, 0, 1, 1], [], []>} : vector<6x144xbf16>, vector<144x128xbf16>, vector<6x128xf32> -> vector<6x128xf32>
    %cst_15 = arith.constant dense<0.000000e+00> : vector<6xf32>
    %59 = vector.multi_reduction <add>, %58, %cst_15 [1] : vector<6x128xf32> to vector<6xf32>
    %60 = vector.shape_cast %59 : vector<6xf32> to vector<6x1xf32>
    %61 = arith.mulf %58, %58 : vector<6x128xf32>
    %cst_16 = arith.constant dense<0.000000e+00> : vector<6xf32>
    %62 = vector.multi_reduction <add>, %61, %cst_16 [1] : vector<6x128xf32> to vector<6xf32>
    %63 = vector.shape_cast %62 : vector<6xf32> to vector<6x1xf32>
    %64 = tpu.concatenate %60, %63 in 1 : vector<6x1xf32>, vector<6x1xf32> -> vector<6x2xf32>
    %c0_17 = arith.constant 0 : index
    %c0_18 = arith.constant 0 : index
    %c0_19 = arith.constant 0 : index
    %c0_20 = arith.constant 0 : index
    %65 = vector.load %arg5[%c0_17, %c0_18, %c0_19, %c0_20] : memref<1x1x6x2xf32, #tpu.memory_space<vmem>>, vector<1x1x6x2xf32>
    %66 = vector.shape_cast %65 : vector<1x1x6x2xf32> to vector<6x2xf32>
    %67 = vector.shape_cast %64 : vector<6x2xf32> to vector<1x1x6x2xf32>
    tpu.vector_store %arg5[%c0_17, %c0_18, %c0_19, %c0_20], %67 {strides = array<i32>} : memref<1x1x6x2xf32, #tpu.memory_space<vmem>>, vector<1x1x6x2xf32>,
    %68 = arith.truncf %58 : vector<6x128xf32> to vector<6x128xbf16>
    %c0_21 = arith.constant 0 : index
    %c0_22 = arith.constant 0 : index
    %c0_23 = arith.constant 0 : index
    %69 = vector.load %arg4[%c0_21, %c0_22, %c0_23] : memref<1x6x128xbf16, #tpu.memory_space<vmem>>, vector<1x6x128xbf16>
    %70 = vector.shape_cast %69 : vector<1x6x128xbf16> to vector<6x128xbf16>
    %71 = vector.shape_cast %68 : vector<6x128xbf16> to vector<1x6x128xbf16>
    tpu.vector_store %arg4[%c0_21, %c0_22, %c0_23], %71 {strides = array<i32>} : memref<1x6x128xbf16, #tpu.memory_space<vmem>>, vector<1x6x128xbf16>,
    return
  }
  func.func @transform_0(%arg0: i32, %arg1: i32) -> (i32, i32, i32, i32) {
    %c0_i32 = arith.constant 0 : i32
    %c0_i32_0 = arith.constant 0 : i32
    %c0_i32_1 = arith.constant 0 : i32
    return %arg0, %arg1, %c0_i32, %c0_i32_0 : i32, i32, i32, i32
  }
  func.func @transform_1(%arg0: i32, %arg1: i32) -> (i32, i32) {
    %c0_i32 = arith.constant 0 : i32
    %c0_i32_0 = arith.constant 0 : i32
    %c0_i32_1 = arith.constant 0 : i32
    return %c0_i32, %c0_i32_0 : i32, i32
  }
  func.func @transform_2(%arg0: i32, %arg1: i32) -> (i32, i32, i32) {
    %c0_i32 = arith.constant 0 : i32
    %c0_i32_0 = arith.constant 0 : i32
    return %arg0, %c0_i32, %arg1 : i32, i32, i32
  }
  func.func @transform_3(%arg0: i32, %arg1: i32) -> (i32, i32, i32, i32) {
    %c0_i32 = arith.constant 0 : i32
    %c0_i32_0 = arith.constant 0 : i32
    %c0_i32_1 = arith.constant 0 : i32
    return %arg0, %arg1, %c0_i32, %c0_i32_0 : i32, i32, i32, i32
  }
}

module attributes {stable_mosaic.version = 11 : i64} {
  func.func @_bn_relu_kernel(%arg0: i32, %arg1: memref<12x256xbf16, #tpu.memory_space<vmem>>, %arg2: memref<12x1xf32, #tpu.memory_space<vmem>>, %arg3: memref<12x1xf32, #tpu.memory_space<vmem>>, %arg4: memref<12x256xbf16, #tpu.memory_space<vmem>>) attributes {dimension_semantics = [#tpu.dimension_semantics<parallel>], iteration_bounds = array<i64: 1>, scalar_prefetch = 0 : i64, scratch_operands = 0 : i64, tpu.core_type = #tpu.core_type<tc>, window_params = [{transform_indices = @transform_0, window_bounds = array<i64: 12, 256>}, {transform_indices = @transform_1, window_bounds = array<i64: 12, 1>}, {transform_indices = @transform_2, window_bounds = array<i64: 12, 1>}, {transform_indices = @transform_3, window_bounds = array<i64: 12, 256>}]} {
    %c0 = arith.constant 0 : index
    %c0_0 = arith.constant 0 : index
    %0 = vector.load %arg1[%c0, %c0_0] : memref<12x256xbf16, #tpu.memory_space<vmem>>, vector<12x256xbf16>
    %1 = arith.extf %0 : vector<12x256xbf16> to vector<12x256xf32>
    %c0_1 = arith.constant 0 : index
    %c0_2 = arith.constant 0 : index
    %2 = vector.load %arg2[%c0_1, %c0_2] : memref<12x1xf32, #tpu.memory_space<vmem>>, vector<12x1xf32>
    %3 = vector.broadcast %2 : vector<12x1xf32> to vector<12x256xf32>
    %4 = arith.mulf %1, %3 : vector<12x256xf32>
    %c0_3 = arith.constant 0 : index
    %c0_4 = arith.constant 0 : index
    %5 = vector.load %arg3[%c0_3, %c0_4] : memref<12x1xf32, #tpu.memory_space<vmem>>, vector<12x1xf32>
    %6 = vector.broadcast %5 : vector<12x1xf32> to vector<12x256xf32>
    %7 = arith.addf %4, %6 : vector<12x256xf32>
    %cst = arith.constant 0.000000e+00 : f32
    %8 = vector.broadcast %cst : f32 to vector<12x256xf32>
    %9 = arith.maximumf %7, %8 : vector<12x256xf32>
    %10 = arith.truncf %9 : vector<12x256xf32> to vector<12x256xbf16>
    %c0_5 = arith.constant 0 : index
    %c0_6 = arith.constant 0 : index
    %11 = vector.load %arg4[%c0_5, %c0_6] : memref<12x256xbf16, #tpu.memory_space<vmem>>, vector<12x256xbf16>
    tpu.vector_store %arg4[%c0_5, %c0_6], %10 {strides = array<i32>} : memref<12x256xbf16, #tpu.memory_space<vmem>>, vector<12x256xbf16>,
    return
  }
  func.func @transform_0(%arg0: i32) -> (i32, i32) {
    %c0_i32 = arith.constant 0 : i32
    %c0_i32_0 = arith.constant 0 : i32
    return %arg0, %c0_i32 : i32, i32
  }
  func.func @transform_1(%arg0: i32) -> (i32, i32) {
    %c0_i32 = arith.constant 0 : i32
    %c0_i32_0 = arith.constant 0 : i32
    return %arg0, %c0_i32 : i32, i32
  }
  func.func @transform_2(%arg0: i32) -> (i32, i32) {
    %c0_i32 = arith.constant 0 : i32
    %c0_i32_0 = arith.constant 0 : i32
    return %arg0, %c0_i32 : i32, i32
  }
  func.func @transform_3(%arg0: i32) -> (i32, i32) {
    %c0_i32 = arith.constant 0 : i32
    %c0_i32_0 = arith.constant 0 : i32
    return %arg0, %c0_i32 : i32, i32
  }
}

module attributes {stable_mosaic.version = 11 : i64} {
  func.func @_conv_stats_kernel(%arg0: i32, %arg1: i32, %arg2: memref<1x1x24x162xbf16, #tpu.memory_space<vmem>>, %arg3: memref<12x216xbf16, #tpu.memory_space<vmem>>, %arg4: memref<1x12x128xbf16, #tpu.memory_space<vmem>>, %arg5: memref<1x1x12x2xf32, #tpu.memory_space<vmem>>) attributes {dimension_semantics = [#tpu.dimension_semantics<parallel>, #tpu.dimension_semantics<parallel>], iteration_bounds = array<i64: 2, 2>, scalar_prefetch = 0 : i64, scratch_operands = 0 : i64, tpu.core_type = #tpu.core_type<tc>, window_params = [{transform_indices = @transform_0, window_bounds = array<i64: 1, 1, 24, 162>}, {pipeline_mode = #tpu.pipeline_mode<synchronous>, transform_indices = @transform_1, window_bounds = array<i64: 12, 216>}, {transform_indices = @transform_2, window_bounds = array<i64: 1, 12, 128>}, {transform_indices = @transform_3, window_bounds = array<i64: 1, 1, 12, 2>}]} {
    %c0 = arith.constant 0 : index
    %c0_0 = arith.constant 0 : index
    %c0_1 = arith.constant 0 : index
    %c0_2 = arith.constant 0 : index
    %0 = vector.load %arg2[%c0, %c0_0, %c0_1, %c0_2] : memref<1x1x24x162xbf16, #tpu.memory_space<vmem>>, vector<1x1x24x162xbf16>
    %1 = vector.shape_cast %0 : vector<1x1x24x162xbf16> to vector<24x162xbf16>
    %2 = tpu.iota {dimensions = array<i32: 1>} : vector<1x128xi32>
    %c16_i32 = arith.constant 16 : i32
    %c0_i32 = arith.constant 0 : i32
    %3 = arith.cmpi eq, %c16_i32, %c0_i32 : i32
    %c1_i32 = arith.constant 1 : i32
    %4 = arith.select %3, %c1_i32, %c16_i32 : i32
    %5 = vector.broadcast %4 : i32 to vector<1x128xi32>
    %6 = arith.remsi %2, %5 : vector<1x128xi32>
    %c0_i32_3 = arith.constant 0 : i32
    %7 = vector.broadcast %c0_i32_3 : i32 to vector<1x128xi32>
    %8 = arith.cmpi ne, %6, %7 : vector<1x128xi32>
    %c0_i32_4 = arith.constant 0 : i32
    %9 = vector.broadcast %c0_i32_4 : i32 to vector<1x128xi32>
    %10 = arith.cmpi slt, %6, %9 : vector<1x128xi32>
    %c0_i32_5 = arith.constant 0 : i32
    %11 = arith.cmpi slt, %4, %c0_i32_5 : i32
    %12 = vector.broadcast %11 : i1 to vector<1x128xi1>
    %13 = vector.broadcast %12 : vector<1x128xi1> to vector<1x128xi1>
    %14 = arith.xori %10, %13 : vector<1x128xi1>
    %15 = arith.andi %14, %8 : vector<1x128xi1>
    %16 = vector.broadcast %4 : i32 to vector<1x128xi32>
    %17 = arith.addi %6, %16 : vector<1x128xi32>
    %18 = arith.select %15, %17, %6 : vector<1x128xi1>, vector<1x128xi32>
    %c0_i32_6 = arith.constant 0 : i32
    %19 = vector.broadcast %c0_i32_6 : i32 to vector<1x128xi32>
    %20 = arith.cmpi ne, %18, %19 : vector<1x128xi32>
    %c15_i32 = arith.constant 15 : i32
    %21 = vector.broadcast %c15_i32 : i32 to vector<1x128xi32>
    %22 = arith.cmpi ne, %18, %21 : vector<1x128xi32>
    %23 = vector.extract_strided_slice %1 {offsets = [0, 0], sizes = [24, 128], strides = [1, 1]} : vector<24x162xbf16> to vector<24x128xbf16>
    %cst = arith.constant 0.000000e+00 : bf16
    %24 = vector.broadcast %cst : bf16 to vector<24x128xbf16>
    %25 = vector.shape_cast %20 : vector<1x128xi1> to vector<1x128xi1>
    %26 = vector.broadcast %25 : vector<1x128xi1> to vector<24x128xi1>
    %27 = arith.select %26, %23, %24 : vector<24x128xi1>, vector<24x128xbf16>
    %28 = vector.extract_strided_slice %1 {offsets = [0, 1], sizes = [24, 128], strides = [1, 1]} : vector<24x162xbf16> to vector<24x128xbf16>
    %29 = vector.extract_strided_slice %1 {offsets = [0, 2], sizes = [24, 128], strides = [1, 1]} : vector<24x162xbf16> to vector<24x128xbf16>
    %cst_7 = arith.constant 0.000000e+00 : bf16
    %30 = vector.broadcast %cst_7 : bf16 to vector<24x128xbf16>
    %31 = vector.shape_cast %22 : vector<1x128xi1> to vector<1x128xi1>
    %32 = vector.broadcast %31 : vector<1x128xi1> to vector<24x128xi1>
    %33 = arith.select %32, %29, %30 : vector<24x128xi1>, vector<24x128xbf16>
    %34 = vector.extract_strided_slice %1 {offsets = [0, 16], sizes = [24, 128], strides = [1, 1]} : vector<24x162xbf16> to vector<24x128xbf16>
    %cst_8 = arith.constant 0.000000e+00 : bf16
    %35 = vector.broadcast %cst_8 : bf16 to vector<24x128xbf16>
    %36 = vector.shape_cast %20 : vector<1x128xi1> to vector<1x128xi1>
    %37 = vector.broadcast %36 : vector<1x128xi1> to vector<24x128xi1>
    %38 = arith.select %37, %34, %35 : vector<24x128xi1>, vector<24x128xbf16>
    %39 = vector.extract_strided_slice %1 {offsets = [0, 17], sizes = [24, 128], strides = [1, 1]} : vector<24x162xbf16> to vector<24x128xbf16>
    %40 = vector.extract_strided_slice %1 {offsets = [0, 18], sizes = [24, 128], strides = [1, 1]} : vector<24x162xbf16> to vector<24x128xbf16>
    %cst_9 = arith.constant 0.000000e+00 : bf16
    %41 = vector.broadcast %cst_9 : bf16 to vector<24x128xbf16>
    %42 = vector.shape_cast %22 : vector<1x128xi1> to vector<1x128xi1>
    %43 = vector.broadcast %42 : vector<1x128xi1> to vector<24x128xi1>
    %44 = arith.select %43, %40, %41 : vector<24x128xi1>, vector<24x128xbf16>
    %45 = vector.extract_strided_slice %1 {offsets = [0, 32], sizes = [24, 128], strides = [1, 1]} : vector<24x162xbf16> to vector<24x128xbf16>
    %cst_10 = arith.constant 0.000000e+00 : bf16
    %46 = vector.broadcast %cst_10 : bf16 to vector<24x128xbf16>
    %47 = vector.shape_cast %20 : vector<1x128xi1> to vector<1x128xi1>
    %48 = vector.broadcast %47 : vector<1x128xi1> to vector<24x128xi1>
    %49 = arith.select %48, %45, %46 : vector<24x128xi1>, vector<24x128xbf16>
    %50 = vector.extract_strided_slice %1 {offsets = [0, 33], sizes = [24, 128], strides = [1, 1]} : vector<24x162xbf16> to vector<24x128xbf16>
    %51 = vector.extract_strided_slice %1 {offsets = [0, 34], sizes = [24, 128], strides = [1, 1]} : vector<24x162xbf16> to vector<24x128xbf16>
    %cst_11 = arith.constant 0.000000e+00 : bf16
    %52 = vector.broadcast %cst_11 : bf16 to vector<24x128xbf16>
    %53 = vector.shape_cast %22 : vector<1x128xi1> to vector<1x128xi1>
    %54 = vector.broadcast %53 : vector<1x128xi1> to vector<24x128xi1>
    %55 = arith.select %54, %51, %52 : vector<24x128xi1>, vector<24x128xbf16>
    %56 = tpu.concatenate %27, %28, %33, %38, %39, %44, %49, %50, %55 in 0 : vector<24x128xbf16>, vector<24x128xbf16>, vector<24x128xbf16>, vector<24x128xbf16>, vector<24x128xbf16>, vector<24x128xbf16>, vector<24x128xbf16>, vector<24x128xbf16>, vector<24x128xbf16> -> vector<216x128xbf16>
    %c0_12 = arith.constant 0 : index
    %c0_13 = arith.constant 0 : index
    %57 = vector.load %arg3[%c0_12, %c0_13] : memref<12x216xbf16, #tpu.memory_space<vmem>>, vector<12x216xbf16>
    %cst_14 = arith.constant dense<0.000000e+00> : vector<12x128xf32>
    %58 = tpu.matmul %57, %56, %cst_14 {dimension_numbers = #tpu.dot_dimension_numbers<[1], [0], [0], [1], [0, 0, 1, 1], [], []>} : vector<12x216xbf16>, vector<216x128xbf16>, vector<12x128xf32> -> vector<12x128xf32>
    %cst_15 = arith.constant dense<0.000000e+00> : vector<12xf32>
    %59 = vector.multi_reduction <add>, %58, %cst_15 [1] : vector<12x128xf32> to vector<12xf32>
    %60 = vector.shape_cast %59 : vector<12xf32> to vector<12x1xf32>
    %61 = arith.mulf %58, %58 : vector<12x128xf32>
    %cst_16 = arith.constant dense<0.000000e+00> : vector<12xf32>
    %62 = vector.multi_reduction <add>, %61, %cst_16 [1] : vector<12x128xf32> to vector<12xf32>
    %63 = vector.shape_cast %62 : vector<12xf32> to vector<12x1xf32>
    %64 = tpu.concatenate %60, %63 in 1 : vector<12x1xf32>, vector<12x1xf32> -> vector<12x2xf32>
    %c0_17 = arith.constant 0 : index
    %c0_18 = arith.constant 0 : index
    %c0_19 = arith.constant 0 : index
    %c0_20 = arith.constant 0 : index
    %65 = vector.load %arg5[%c0_17, %c0_18, %c0_19, %c0_20] : memref<1x1x12x2xf32, #tpu.memory_space<vmem>>, vector<1x1x12x2xf32>
    %66 = vector.shape_cast %65 : vector<1x1x12x2xf32> to vector<12x2xf32>
    %67 = vector.shape_cast %64 : vector<12x2xf32> to vector<1x1x12x2xf32>
    tpu.vector_store %arg5[%c0_17, %c0_18, %c0_19, %c0_20], %67 {strides = array<i32>} : memref<1x1x12x2xf32, #tpu.memory_space<vmem>>, vector<1x1x12x2xf32>,
    %68 = arith.truncf %58 : vector<12x128xf32> to vector<12x128xbf16>
    %c0_21 = arith.constant 0 : index
    %c0_22 = arith.constant 0 : index
    %c0_23 = arith.constant 0 : index
    %69 = vector.load %arg4[%c0_21, %c0_22, %c0_23] : memref<1x12x128xbf16, #tpu.memory_space<vmem>>, vector<1x12x128xbf16>
    %70 = vector.shape_cast %69 : vector<1x12x128xbf16> to vector<12x128xbf16>
    %71 = vector.shape_cast %68 : vector<12x128xbf16> to vector<1x12x128xbf16>
    tpu.vector_store %arg4[%c0_21, %c0_22, %c0_23], %71 {strides = array<i32>} : memref<1x12x128xbf16, #tpu.memory_space<vmem>>, vector<1x12x128xbf16>,
    return
  }
  func.func @transform_0(%arg0: i32, %arg1: i32) -> (i32, i32, i32, i32) {
    %c0_i32 = arith.constant 0 : i32
    %c0_i32_0 = arith.constant 0 : i32
    %c0_i32_1 = arith.constant 0 : i32
    return %arg0, %arg1, %c0_i32, %c0_i32_0 : i32, i32, i32, i32
  }
  func.func @transform_1(%arg0: i32, %arg1: i32) -> (i32, i32) {
    %c0_i32 = arith.constant 0 : i32
    %c0_i32_0 = arith.constant 0 : i32
    %c0_i32_1 = arith.constant 0 : i32
    return %c0_i32, %c0_i32_0 : i32, i32
  }
  func.func @transform_2(%arg0: i32, %arg1: i32) -> (i32, i32, i32) {
    %c0_i32 = arith.constant 0 : i32
    %c0_i32_0 = arith.constant 0 : i32
    return %arg0, %c0_i32, %arg1 : i32, i32, i32
  }
  func.func @transform_3(%arg0: i32, %arg1: i32) -> (i32, i32, i32, i32) {
    %c0_i32 = arith.constant 0 : i32
    %c0_i32_0 = arith.constant 0 : i32
    %c0_i32_1 = arith.constant 0 : i32
    return %arg0, %arg1, %c0_i32, %c0_i32_0 : i32, i32, i32, i32
  }
}

module attributes {stable_mosaic.version = 11 : i64} {
  func.func @_bn_relu_kernel(%arg0: i32, %arg1: memref<24x256xbf16, #tpu.memory_space<vmem>>, %arg2: memref<24x1xf32, #tpu.memory_space<vmem>>, %arg3: memref<24x1xf32, #tpu.memory_space<vmem>>, %arg4: memref<24x256xbf16, #tpu.memory_space<vmem>>) attributes {dimension_semantics = [#tpu.dimension_semantics<parallel>], iteration_bounds = array<i64: 1>, scalar_prefetch = 0 : i64, scratch_operands = 0 : i64, tpu.core_type = #tpu.core_type<tc>, window_params = [{transform_indices = @transform_0, window_bounds = array<i64: 24, 256>}, {transform_indices = @transform_1, window_bounds = array<i64: 24, 1>}, {transform_indices = @transform_2, window_bounds = array<i64: 24, 1>}, {transform_indices = @transform_3, window_bounds = array<i64: 24, 256>}]} {
    %c0 = arith.constant 0 : index
    %c0_0 = arith.constant 0 : index
    %0 = vector.load %arg1[%c0, %c0_0] : memref<24x256xbf16, #tpu.memory_space<vmem>>, vector<24x256xbf16>
    %1 = arith.extf %0 : vector<24x256xbf16> to vector<24x256xf32>
    %c0_1 = arith.constant 0 : index
    %c0_2 = arith.constant 0 : index
    %2 = vector.load %arg2[%c0_1, %c0_2] : memref<24x1xf32, #tpu.memory_space<vmem>>, vector<24x1xf32>
    %3 = vector.broadcast %2 : vector<24x1xf32> to vector<24x256xf32>
    %4 = arith.mulf %1, %3 : vector<24x256xf32>
    %c0_3 = arith.constant 0 : index
    %c0_4 = arith.constant 0 : index
    %5 = vector.load %arg3[%c0_3, %c0_4] : memref<24x1xf32, #tpu.memory_space<vmem>>, vector<24x1xf32>
    %6 = vector.broadcast %5 : vector<24x1xf32> to vector<24x256xf32>
    %7 = arith.addf %4, %6 : vector<24x256xf32>
    %cst = arith.constant 0.000000e+00 : f32
    %8 = vector.broadcast %cst : f32 to vector<24x256xf32>
    %9 = arith.maximumf %7, %8 : vector<24x256xf32>
    %10 = arith.truncf %9 : vector<24x256xf32> to vector<24x256xbf16>
    %c0_5 = arith.constant 0 : index
    %c0_6 = arith.constant 0 : index
    %11 = vector.load %arg4[%c0_5, %c0_6] : memref<24x256xbf16, #tpu.memory_space<vmem>>, vector<24x256xbf16>
    tpu.vector_store %arg4[%c0_5, %c0_6], %10 {strides = array<i32>} : memref<24x256xbf16, #tpu.memory_space<vmem>>, vector<24x256xbf16>,
    return
  }
  func.func @transform_0(%arg0: i32) -> (i32, i32) {
    %c0_i32 = arith.constant 0 : i32
    %c0_i32_0 = arith.constant 0 : i32
    return %arg0, %c0_i32 : i32, i32
  }
  func.func @transform_1(%arg0: i32) -> (i32, i32) {
    %c0_i32 = arith.constant 0 : i32
    %c0_i32_0 = arith.constant 0 : i32
    return %arg0, %c0_i32 : i32, i32
  }
  func.func @transform_2(%arg0: i32) -> (i32, i32) {
    %c0_i32 = arith.constant 0 : i32
    %c0_i32_0 = arith.constant 0 : i32
    return %arg0, %c0_i32 : i32, i32
  }
  func.func @transform_3(%arg0: i32) -> (i32, i32) {
    %c0_i32 = arith.constant 0 : i32
    %c0_i32_0 = arith.constant 0 : i32
    return %arg0, %c0_i32 : i32, i32
  }
}

</mosaic_0001>

<llo_original>
// kernel: tile.43
$region0: #{tile.43}
  #allocation0 [shape = 's32[1]{0}', space=sflag, size = 0x4, scoped, tag = 'scoped memory for tile.43']
  %s0 = inlined_call_operand.vmem [shape: f32[4], index: 0, kind: input, shape index: {}]
  %s1 = inlined_call_operand.vmem [shape: f32[2,4], index: 1, kind: output, shape index: {}]
  // Predicated region
  $region2: #{tile.43} parent=0 // pred_check
    _
  $region3: #{tile.43} parent=0 // pred_check_branch
    %3 = sbr.rel (0) target = $region5
  $region4: #{tile.43} parent=0 // pred_region
    _
  $region5: #{tile.43} parent=0 // pred_fallthru
    _
  %v4 = vld [vmem:[%s0] ss:$0 sm:$0xff]
  %5 = vst [vmem:[%s1] sm:$0x3] %v4

// kernel: tile.0
$region0: #{tile.0}
  %s0 = inlined_call_operand.vmem [shape: f32[2,4], index: 0, kind: input, shape index: {}]
  %s1 = inlined_call_operand.vmem [shape: f32[8,1], index: 1, kind: output, shape index: {}]
  $region1: #{tile.0} parent=0
    #allocation0 [shape = 'u8[4096]{0}', space=vmem, size = 0x1000, scoped, tag = 'scoped mem for input reshape']
    %s3 = sshllo.u32 0, 2
    %v4 = vld [vmem:[%s0] sm:%s3]
    %5 = vst [vmem:[#allocation0] sm:%s3] %v4
    %v6 = vld [vmem:[#allocation0] sm:$0x3]
    %vm7 = vcmask 7168
    %8 = vst.msk [vmem:[%s1] ss:$4 sm:$0x3] %vm7, %v6
    %v9 = vld [vmem:[#allocation0] sm:$0x3]
    %10 = vrot.lane.b32.xlu0 %v9, 127
    %v11 = vpop.permute.xlu0 %10
    %vm12 = vcmask 7168
    %s13 = scalar_lea.vmem %s1, 1
    %14 = vst.msk [vmem:[%s13] ss:$4 sm:$0x3] %vm12, %v11
    %v15 = vld [vmem:[#allocation0] sm:$0x3]
    %16 = vrot.lane.b32.xlu0 %v15, 126
    %v17 = vpop.permute.xlu0 %16
    %vm18 = vcmask 7168
    %s19 = scalar_lea.vmem %s1, 2
    %20 = vst.msk [vmem:[%s19] ss:$4 sm:$0x3] %vm18, %v17
    %v21 = vld [vmem:[#allocation0] sm:$0x3]
    %22 = vrot.lane.b32.xlu0 %v21, 125
    %v23 = vpop.permute.xlu0 %22
    %vm24 = vcmask 7168
    %s25 = scalar_lea.vmem %s1, 3
    %26 = vst.msk [vmem:[%s25] ss:$4 sm:$0x3] %vm24, %v23

// kernel: _lambda_.9
$region0: #{_lambda_.9}
  #allocation0 [shape = 'u32[]', space=smem, size = 0x4, offset = 0x4, fixed_abs, tag = 'smem constant byte address 0x4 - core index']
  #allocation1 [shape = 'u32[144,128]{1,0:T(1,128)}', space=vmem, size = 0x12000, scoped, tag = 'internal scratch']
  %s0 = inlined_call_operand.vmem [shape: bf16[8,256], index: 0, kind: input, shape index: {}]
  %s1 = inlined_call_operand.vmem [shape: f32[8,1], index: 1, kind: input, shape index: {}]
  %s2 = inlined_call_operand.vmem [shape: f32[8,1], index: 2, kind: input, shape index: {}]
  %s3 = inlined_call_operand.vmem [shape: bf16[8,256], index: 3, kind: output, shape index: {}]
  %s4 = sld [smem:[#allocation0]]
  $region22: #{_lambda_.9} parent=0
    _
  %s6 = ssub.s32 1, %s4
  %s7 = scalar_select 0, %s6, %s4
  // Predicated region
  $region2: #{_lambda_.9} parent=0 // pred_check
    _
  $region3: #{_lambda_.9} parent=0 // pred_check_branch
    %9 = sbr.rel (0) target = $region5
  $region4: #{_lambda_.9} parent=0 // pred_region
    _
  $region5: #{_lambda_.9} parent=0 // pred_fallthru
    _
  // Predicated region
  $region6: #{_lambda_.9} parent=0 // pred_check
    _
  $region7: #{_lambda_.9} parent=0 // pred_check_branch
    %11 = sbr.rel (0) target = $region9
  $region8: #{_lambda_.9} parent=0 // pred_region
    _
  $region9: #{_lambda_.9} parent=0 // pred_fallthru
    _
  // Predicated region
  $region10: #{_lambda_.9} parent=0 // pred_check
    _
  $region11: #{_lambda_.9} parent=0 // pred_check_branch
    %13 = sbr.rel (0) target = $region13
  $region12: #{_lambda_.9} parent=0 // pred_region
    _
  $region13: #{_lambda_.9} parent=0 // pred_fallthru
    _
  %v14 = vld [vmem:[%s0] sm:$0xff]
  %v15 = vunpack.c.l.bf16 %v14
  %v16 = vunpack.c.h.bf16 %v14
  %v17 = vld [vmem:[%s1] sm:$0xff]
  %19 = vset.pattern.permute.xlu0 0
  %20 = vperm.xlu0 %19, %v17
  %v21 = vpop.permute.xlu0 %20
  %v23 = vmul.f32 %v15, %v21
  %v24 = vmul.f32 %v16, %v21
  %v25 = vld [vmem:[%s2] sm:$0xff]
  %27 = vset.pattern.permute.xlu0 0
  %28 = vperm.xlu0 %27, %v25
  %v29 = vpop.permute.xlu0 %28
  %v31 = vadd.f32 %v23, %v29
  %v32 = vadd.f32 %v24, %v29
  %v33 = vmax.f32 %v31, 0.0
  %v34 = vmax.f32 %v32, 0.0
  %v35 = vpack.c.bf16 %v33, %v33
  %v36 = vpack.c.bf16 %v34, %v34
  %v39 = vunpack.c.l.b16 %v35
  %v40 = vunpack.c.l.b16 %v36
  %v41 = vpack.c.b16 %v40, %v39
  %43 = vst [vmem:[%s3] sm:$0xff] %v41
  // Predicated region
  $region14: #{_lambda_.9} parent=0 // pred_check
    _
  $region15: #{_lambda_.9} parent=0 // pred_check_branch
    %45 = sbr.rel (0) target = $region17
  $region16: #{_lambda_.9} parent=0 // pred_region
    _
  $region17: #{_lambda_.9} parent=0 // pred_fallthru
    _
  // Predicated region
  $region18: #{_lambda_.9} parent=0 // pred_check
    _
  $region19: #{_lambda_.9} parent=0 // pred_check_branch
    %47 = sbr.rel (0) target = $region21
  $region20: #{_lambda_.9} parent=0 // pred_region
    _
  $region21: #{_lambda_.9} parent=0 // pred_fallthru
    _

// kernel: _lambda_.8
$region0: #{_lambda_.8}
  #allocation0 [shape = 'u32[]', space=smem, size = 0x4, offset = 0x4, fixed_abs, tag = 'smem constant byte address 0x4 - core index']
  #allocation1 [shape = 'u32[144,128]{1,0:T(1,128)}', space=vmem, size = 0x12000, scoped, tag = 'internal scratch']
  %s0 = inlined_call_operand.vmem [shape: bf16[2,2,8,162], index: 0, kind: input, shape index: {}]
  %s1 = inlined_call_operand.vmem [shape: bf16[4,72], index: 1, kind: input, shape index: {}]
  %s2 = inlined_call_operand.vmem [shape: bf16[2,4,256], index: 2, kind: output, shape index: {0}]
  %s3 = inlined_call_operand.vmem [shape: f32[2,2,4,2], index: 3, kind: output, shape index: {1}]
  %4 = xla_tuple %s2, %s3
  %s5 = sld [smem:[#allocation0]]
  $region49: #{_lambda_.8} parent=0
    _
  %s7 = ssub.s32 1, %s5
  %s8 = scalar_select 0, %s7, %s5
  loop: start=0, step=1, limit=6
  $region2: #{_lambda_.8} parent=0 // loop_pre_header
    _
  $region3: #{_lambda_.8} parent=0 // loop_header
    %s10 = sphi 0, %s14
    %p11 = scmp.ge.s32.totalorder %s10, 6
    %s17 = sphi 0, %s29
    %s18 = sphi 0, %s25
    %s19 = sphi 0, %s17
    %s20 = sphi 0, %s18
    %s21 = sphi 0, %s19
    %s22 = sphi 0, %s20
    %s34 = sphi 0, %s36
    %s37 = sphi 0, %s34
    %s38 = sphi 0, %s37
    %s54 = sphi 0, %s38
    %s58 = sphi 0, %s58
    %s60 = sphi 0, %s58
    %s61 = sphi 0, %s60
    %s75 = sphi 0, %s61
    %s83 = sphi 0, %s85
    %s86 = sphi 0, %s83
    %s87 = sphi 0, %s86
    %s103 = sphi 0, %s87
    %s111 = sphi 0, %s113
    %s114 = sphi 0, %s111
    %s115 = sphi 0, %s114
    %s131 = sphi 0, %s115
  $region4: #{_lambda_.8} parent=0 // loop_header_branch
    %13 = sbr.rel (%p11) target = $region8
  $region5: #{_lambda_.8} parent=0 // loop_body
    %s15 = ssub.s32 %s10, 1
    %s16 = ssub.s32 %s10, 2
    %s23 = sadd.s32 1, %s18
    %p24 = scmp.ge.s32.totalorder %s23, 2
    %s25 = scalar_select %p24, 0, %s23
    %s26 = sadd.s32 1, %s17
    %s27 = scalar_select %p24, %s26, %s17
    %p28 = scmp.ge.s32.totalorder %s27, 2
    %s29 = scalar_select %p28, 0, %s27
    %s30 = ssub.s32 %s17, %s29
    %s31 = ssub.s32 %s18, %s25
    %s32 = sor.u32 %s30, %s31
    %p33 = scmp.eq.s32.totalorder %s32, 0
    %s35 = sadd.s32 %s34, 1
    %s36 = scalar_select %p33, %s34, %s35
    %p39 = pneg %p33
    %p40 = scmp.eq.s32.totalorder %s10, 3
    %p41 = por %p39, %p40
    %p42 = scmp.ne.s32.totalorder %s34, %s37
    %p43 = scmp.eq.s32.totalorder %s10, 0
    %p44 = por %p42, %p43
    %p45 = scmp.ne.s32.totalorder %s34, %s37
    %p46 = scmp.eq.s32.totalorder %s15, 3
    %p47 = por %p45, %p46
    %p48 = scmp.ne.s32.totalorder %s37, %s38
    %p49 = scmp.eq.s32.totalorder %s15, 0
    %p50 = por %p48, %p49
    %p51 = scmp.ne.s32.totalorder %s37, %s38
    %p52 = scmp.eq.s32.totalorder %s16, 3
    %p53 = por %p51, %p52
    %p55 = scmp.ne.s32.totalorder %s38, %s54
    %p56 = scmp.eq.s32.totalorder %s16, 0
    %p57 = por %p55, %p56
    %s59 = sadd.s32 %s58, 1
    %p62 = scmp.eq.s32.totalorder %s10, 3
    %p63 = scmp.ne.s32.totalorder %s58, %s60
    %p64 = scmp.eq.s32.totalorder %s10, 0
    %p65 = por %p63, %p64
    %p66 = scmp.ne.s32.totalorder %s58, %s60
    %p67 = scmp.eq.s32.totalorder %s15, 3
    %p68 = por %p66, %p67
    %p69 = scmp.ne.s32.totalorder %s60, %s61
    %p70 = scmp.eq.s32.totalorder %s15, 0
    %p71 = por %p69, %p70
    %p72 = scmp.ne.s32.totalorder %s60, %s61
    %p73 = scmp.eq.s32.totalorder %s16, 3
    %p74 = por %p72, %p73
    %p76 = scmp.ne.s32.totalorder %s61, %s75
    %p77 = scmp.eq.s32.totalorder %s16, 0
    %p78 = por %p76, %p77
    %s79 = ssub.s32 %s17, %s29
    %s80 = ssub.s32 %s18, %s25
    %s81 = sor.u32 %s79, %s80
    %p82 = scmp.eq.s32.totalorder %s81, 0
    %s84 = sadd.s32 %s83, 1
    %s85 = scalar_select %p82, %s83, %s84
    %p88 = pneg %p82
    %p89 = scmp.eq.s32.totalorder %s10, 3
    %p90 = por %p88, %p89
    %p91 = scmp.ne.s32.totalorder %s83, %s86
    %p92 = scmp.eq.s32.totalorder %s10, 0
    %p93 = por %p91, %p92
    %p94 = scmp.ne.s32.totalorder %s83, %s86
    %p95 = scmp.eq.s32.totalorder %s15, 3
    %p96 = por %p94, %p95
    %p97 = scmp.ne.s32.totalorder %s86, %s87
    %p98 = scmp.eq.s32.totalorder %s15, 0
    %p99 = por %p97, %p98
    %p100 = scmp.ne.s32.totalorder %s86, %s87
    %p101 = scmp.eq.s32.totalorder %s16, 3
    %p102 = por %p100, %p101
    %p104 = scmp.ne.s32.totalorder %s87, %s103
    %p105 = scmp.eq.s32.totalorder %s16, 0
    %p106 = por %p104, %p105
    %s107 = ssub.s32 %s17, %s29
    %s108 = ssub.s32 %s18, %s25
    %s109 = sor.u32 %s107, %s108
    %p110 = scmp.eq.s32.totalorder %s109, 0
    %s112 = sadd.s32 %s111, 1
    %s113 = scalar_select %p110, %s111, %s112
    %p116 = pneg %p110
    %p117 = scmp.eq.s32.totalorder %s10, 3
    %p118 = por %p116, %p117
    %p119 = scmp.ne.s32.totalorder %s111, %s114
    %p120 = scmp.eq.s32.totalorder %s10, 0
    %p121 = por %p119, %p120
    %p122 = scmp.ne.s32.totalorder %s111, %s114
    %p123 = scmp.eq.s32.totalorder %s15, 3
    %p124 = por %p122, %p123
    %p125 = scmp.ne.s32.totalorder %s114, %s115
    %p126 = scmp.eq.s32.totalorder %s15, 0
    %p127 = por %p125, %p126
    %p128 = scmp.ne.s32.totalorder %s114, %s115
    %p129 = scmp.eq.s32.totalorder %s16, 3
    %p130 = por %p128, %p129
    %p132 = scmp.ne.s32.totalorder %s115, %s131
    %p133 = scmp.eq.s32.totalorder %s16, 0
    %p134 = por %p132, %p133
    %p135 = scmp.le.s32.totalorder 1, %s10
    %p136 = scmp.lt.s32.totalorder %s10, 5
    %p137 = pnand %p135, %p136
    %p138 = pneg %p137
    // Predicated region
    $region9: #{_lambda_.8} parent=5 // pred_check
      _
    $region10: #{_lambda_.8} parent=5 // pred_check_branch
      %140 = sbr.rel (%p137) target = $region12
    $region11: #{_lambda_.8} parent=5 // pred_region
      %s141 = ssub.s32 %s10, 1
      // Predicated region
      $region13: #{_lambda_.8} parent=11 // pred_check
        %p142 = pneg %p71
      $region14: #{_lambda_.8} parent=11 // pred_check_branch
        %144 = sbr.rel (%p142) target = $region16
      $region15: #{_lambda_.8} parent=11 // pred_region
        _
      $region16: #{_lambda_.8} parent=11 // pred_fallthru
        _
    $region12: #{_lambda_.8} parent=5 // pred_fallthru
      _
    %p145 = scmp.lt.s32.totalorder %s10, 4
    // Predicated region
    $region17: #{_lambda_.8} parent=5 // pred_check
      %p146 = pneg %p145
    $region18: #{_lambda_.8} parent=5 // pred_check_branch
      %148 = sbr.rel (%p146) target = $region20
    $region19: #{_lambda_.8} parent=5 // pred_region
      // Predicated region
      $region21: #{_lambda_.8} parent=19 // pred_check
        %p149 = pneg %p44
      $region22: #{_lambda_.8} parent=19 // pred_check_branch
        %151 = sbr.rel (%p149) target = $region24
      $region23: #{_lambda_.8} parent=19 // pred_region
        %p152 = scmp.lt.s32.totalorder %s17, 1
        %s153 = scalar_select %p152, %s17, 1
        %p154 = scmp.lt.s32.totalorder %s18, 1
        %s155 = scalar_select %p154, %s18, 1
        %s156 = smul.addr %s155, 2
        %s157 = smul.addr %s153, 4
        %s158 = sadd.s32 %s156, %s157
        %s159 = smul.addr %s158, 4
        %s160 = scalar_lea.vmem %s0, %s159
      $region24: #{_lambda_.8} parent=19 // pred_fallthru
        _
    $region20: #{_lambda_.8} parent=5 // pred_fallthru
      _
    %p161 = scmp.le.s32.totalorder 1, %s10
    %p162 = scmp.lt.s32.totalorder %s10, 5
    %p163 = pnand %p161, %p162
    %p164 = pneg %p163
    // Predicated region
    $region25: #{_lambda_.8} parent=5 // pred_check
      _
    $region26: #{_lambda_.8} parent=5 // pred_check_branch
      %166 = sbr.rel (%p163) target = $region28
    $region27: #{_lambda_.8} parent=5 // pred_region
      %s167 = ssub.s32 %s10, 1
      %p168 = scmp.lt.s32.totalorder %s19, 1
      %s169 = scalar_select %p168, %s19, 1
      %p170 = scmp.lt.s32.totalorder %s20, 1
      %s171 = scalar_select %p170, %s20, 1
      %s172 = smul.addr %s171, 2
      %s173 = smul.addr %s169, 4
      %s174 = sadd.s32 %s172, %s173
      %s175 = smul.addr %s174, 4
      %s176 = scalar_lea.vmem %s0, %s175
      %p177 = pneg %p50
      %p178 = pneg %p47
      %p179 = pneg %p71
      %p180 = pneg %p68
      %p181 = pneg %p99
      %p182 = pneg %p96
      %p183 = scmp.lt.s32.totalorder %s19, 1
      %s184 = scalar_select %p183, %s19, 1
      %p185 = scmp.lt.s32.totalorder %s20, 1
      %s186 = scalar_select %p185, %s20, 1
      %s187 = smul.addr %s184, 2
      %s188 = sadd.s32 %s186, %s187
      %s189 = smul.addr %s188, 2
      %s190 = scalar_lea.vmem %s2, %s189
      %p191 = pneg %p127
      %p192 = pneg %p124
      %p193 = scmp.lt.s32.totalorder %s19, 1
      %s194 = scalar_select %p193, %s19, 1
      %p195 = scmp.lt.s32.totalorder %s20, 1
      %s196 = scalar_select %p195, %s20, 1
      %s197 = smul.addr %s194, 2
      %s198 = sadd.s32 %s196, %s197
      %s199 = smul.addr %s198, 4
      %s200 = scalar_lea.vmem %s3, %s199
      %p201 = scmp.lt.s32.totalorder %s19, 1
      %s202 = scalar_select %p201, %s19, 1
      %p203 = scmp.lt.s32.totalorder %s20, 1
      %s204 = scalar_select %p203, %s20, 1
      %s205 = smul.addr %s204, 2
      %s206 = smul.addr %s202, 4
      %s207 = sadd.s32 %s205, %s206
      %s208 = smul.addr %s207, 4
      %s209 = scalar_lea.vmem %s0, %s208
      %p210 = scmp.lt.s32.totalorder %s19, 1
      %s211 = scalar_select %p210, %s19, 1
      %p212 = scmp.lt.s32.totalorder %s20, 1
      %s213 = scalar_select %p212, %s20, 1
      %s214 = smul.addr %s211, 2
      %s215 = sadd.s32 %s213, %s214
      %s216 = smul.addr %s215, 2
      %s217 = scalar_lea.vmem %s2, %s216
      %p218 = scmp.lt.s32.totalorder %s19, 1
      %s219 = scalar_select %p218, %s19, 1
      %p220 = scmp.lt.s32.totalorder %s20, 1
      %s221 = scalar_select %p220, %s20, 1
      %s222 = smul.addr %s219, 2
      %s223 = sadd.s32 %s221, %s222
      %s224 = smul.addr %s223, 4
      %s225 = scalar_lea.vmem %s3, %s224
      %v229 = vld [vmem:[%s209] sm:$0xff]
      %v230 = vlaneseq
      %v231 = vand.u32 %v230, 127
      %vm232 = vcmp.lt.s32.totalorder %v231, 0
      %v233 = vsub.s32 0, %v231
      %v234 = vsel %vm232, %v233, %v231
      %v235 = vshrl.u32 %v234, 4
      %v236 = vand.u32 %v234, 15
      %v237 = vsub.s32 0, %v236
      %v238 = vsel %vm232, %v237, %v236
      %vm239 = vcmp.ne.s32.totalorder %v238, 0
      %vm240 = vcmp.lt.s32.totalorder %v238, 0
      %vm241 = vmand %vm240, %vm239
      %v242 = vadd.s32 %v238, 16
      %v243 = vsel %vm241, %v242, %v238
      %vm244 = vcmp.ne.s32.totalorder %v243, 0
      %vm245 = vcmp.ne.s32.totalorder %v243, 15
      %v246 = vsel %vm244, 1, 0
      %vm247 = vcmp.eq.s32.totalorder %v246, 1
      %vm248 = vmpackc.low %vm247, %vm247
      %v249 = vsel %vm248, %v229, 0
      %v250 = vsel %vm245, 1, 0
      %vm251 = vcmp.eq.s32.totalorder %v250, 1
      %vm252 = vmpackc.low %vm251, %vm251
      %v253 = vsel %vm252, 65537, 0
      %254 = vrot.lane.b32.xlu0 %v253, 2
      %v255 = vpop.permute.xlu0 %254
      %v256 = vrot.slane %v255, 4
      %vm257 = vcmask 15360
      %v258 = vsel %vm257, %v256, %v255
      %vm259 = vcmp.ne.s16.totalorder %v258, 0
      %v260 = vsel %vm259, %v229, 0
      %v261 = vsel %vm248, 65537, 0
      %262 = vrot.lane.b32.xlu0 %v261, 16
      %v263 = vpop.permute.xlu0 %262
      %v264 = vrot.slane %v263, 4
      %vm265 = vcmask 130048
      %v266 = vsel %vm265, %v264, %v263
      %vm267 = vcmp.ne.s16.totalorder %v266, 0
      %v268 = vsel %vm267, %v229, 0
      %269 = vrot.lane.b32.xlu0 %v253, 18
      %v270 = vpop.permute.xlu0 %269
      %v271 = vrot.slane %v270, 4
      %vm272 = vcmask 146432
      %v273 = vsel %vm272, %v271, %v270
      %vm274 = vcmp.ne.s16.totalorder %v273, 0
      %v275 = vsel %vm274, %v229, 0
      %276 = vrot.lane.b32.xlu0 %v261, 32
      %v277 = vpop.permute.xlu0 %276
      %v278 = vrot.slane %v277, 4
      %vm279 = vcmask 261120
      %v280 = vsel %vm279, %v278, %v277
      %vm281 = vcmp.ne.s16.totalorder %v280, 0
      %v282 = vsel %vm281, %v229, 0
      %283 = vrot.lane.b32.xlu0 %v253, 34
      %v284 = vpop.permute.xlu0 %283
      %v285 = vrot.slane %v284, 4
      %vm286 = vcmask 277504
      %v287 = vsel %vm286, %v285, %v284
      %vm288 = vcmp.ne.s16.totalorder %v287, 0
      %v289 = vsel %vm288, %v229, 0
      %v291 = vunpack.c.l.b16 %v229
      %v292 = vunpack.c.h.b16 %v229
      %v293 = vpack.c.b16 %v291, %v291
      %v294 = vpack.c.b16 %v292, %v292
      %295 = vrot.lane.b32.xlu0 %v293, 127
      %v296 = vpop.permute.xlu0 %295
      %297 = vrot.lane.b32.xlu0 %v294, 127
      %v298 = vpop.permute.xlu0 %297
      %vm299 = vcmask 1039360
      %v300 = vsel %vm299, %v296, %v298
      %v302 = vunpack.c.l.b16 %v260
      %v303 = vunpack.c.h.b16 %v260
      %v304 = vpack.c.b16 %v302, %v302
      %v305 = vpack.c.b16 %v303, %v303
      %306 = vrot.lane.b32.xlu0 %v304, 126
      %v307 = vpop.permute.xlu0 %306
      %308 = vrot.lane.b32.xlu0 %v305, 126
      %v309 = vpop.permute.xlu0 %308
      %vm310 = vcmask 1031168
      %v311 = vsel %vm310, %v307, %v309
      %v313 = vunpack.c.l.b16 %v268
      %v314 = vunpack.c.h.b16 %v268
      %v315 = vpack.c.b16 %v313, %v313
      %v316 = vpack.c.b16 %v314, %v314
      %317 = vrot.lane.b32.xlu0 %v315, 112
      %v318 = vpop.permute.xlu0 %317
      %319 = vrot.lane.b32.xlu0 %v316, 112
      %v320 = vpop.permute.xlu0 %319
      %vm321 = vcmask 916480
      %v322 = vsel %vm321, %v318, %v320
      %323 = vrot.lane.b32.xlu0 %v293, 111
      %v324 = vpop.permute.xlu0 %323
      %325 = vrot.lane.b32.xlu0 %v294, 111
      %v326 = vpop.permute.xlu0 %325
      %vm327 = vcmask 908288
      %v328 = vsel %vm327, %v324, %v326
      %v330 = vunpack.c.l.b16 %v275
      %v331 = vunpack.c.h.b16 %v275
      %v332 = vpack.c.b16 %v330, %v330
      %v333 = vpack.c.b16 %v331, %v331
      %334 = vrot.lane.b32.xlu0 %v332, 110
      %v335 = vpop.permute.xlu0 %334
      %336 = vrot.lane.b32.xlu0 %v333, 110
      %v337 = vpop.permute.xlu0 %336
      %vm338 = vcmask 900096
      %v339 = vsel %vm338, %v335, %v337
      %v341 = vunpack.c.l.b16 %v282
      %v342 = vunpack.c.h.b16 %v282
      %v343 = vpack.c.b16 %v341, %v341
      %v344 = vpack.c.b16 %v342, %v342
      %345 = vrot.lane.b32.xlu0 %v343, 96
      %v346 = vpop.permute.xlu0 %345
      %347 = vrot.lane.b32.xlu0 %v344, 96
      %v348 = vpop.permute.xlu0 %347
      %vm349 = vcmask 785408
      %v350 = vsel %vm349, %v346, %v348
      %351 = vrot.lane.b32.xlu0 %v293, 95
      %v352 = vpop.permute.xlu0 %351
      %353 = vrot.lane.b32.xlu0 %v294, 95
      %v354 = vpop.permute.xlu0 %353
      %vm355 = vcmask 777216
      %v356 = vsel %vm355, %v352, %v354
      %v358 = vunpack.c.l.b16 %v289
      %v359 = vunpack.c.h.b16 %v289
      %v360 = vpack.c.b16 %v358, %v358
      %v361 = vpack.c.b16 %v359, %v359
      %362 = vrot.lane.b32.xlu0 %v360, 94
      %v363 = vpop.permute.xlu0 %362
      %364 = vrot.lane.b32.xlu0 %v361, 94
      %v365 = vpop.permute.xlu0 %364
      %vm366 = vcmask 769024
      %v367 = vsel %vm366, %v363, %v365
      %vm368 = vcmask 1043456
      %v371 = vsel %vm368, %v249, %v300
      %v375 = vsel %vm368, %v311, %v322
      %v379 = vsel %vm368, %v328, %v339
      %v383 = vsel %vm368, %v350, %v356
      %v385 = vld [vmem:[%s1] sm:$0x3]
      %vm386 = vcmask 588800
      %v388 = vsel %vm386, %v385, 0
      %v391 = vsel %vm368, %v367, 0
      %393 = vmatprep.subr.bf16.mxu0 0
      %394 = vmatpush1.bf16.msra.mxu0 %v371
      %395 = vmatprep.subr.bf16.mxu0 0
      %396 = vmatpush1.bf16.msra.mxu0 %v375
      %397 = vmatprep.subr.bf16.mxu0 0
      %398 = vmatpush1.bf16.msra.mxu0 %v379
      %399 = vmatprep.subr.bf16.mxu0 0
      %400 = vmatpush1.bf16.msra.mxu0 %v383
      %401 = vmatprep.subr.bf16.mxu0 0
      %402 = vmatpush1.bf16.msra.mxu0 %v391
      %403 = vmatprep.subr.bf16.mxu0 0
      %404 = vmatpush1.bf16.msra.mxu0 0
      %405 = vmatprep.subr.bf16.mxu0 0
      %406 = vmatpush1.bf16.msra.mxu0 0
      %407 = vmatprep.subr.bf16.mxu0 0
      %408 = vmatpush1.bf16.msra.mxu0 0
      %409 = vmatprep.subr.bf16.mxu0 0
      %410 = vmatpush1.bf16.msra.mxu0 0
      %411 = vmatprep.subr.bf16.mxu0 0
      %412 = vmatpush1.bf16.msra.mxu0 0
      %413 = vmatprep.subr.bf16.mxu0 0
      %414 = vmatpush1.bf16.msra.mxu0 0
      %415 = vmatprep.subr.bf16.mxu0 0
      %416 = vmatpush1.bf16.msra.mxu0 0
      %417 = vmatprep.subr.bf16.mxu0 0
      %418 = vmatpush1.bf16.msra.mxu0 0
      %419 = vmatprep.subr.bf16.mxu0 0
      %420 = vmatpush1.bf16.msra.mxu0 0
      %421 = vmatprep.subr.bf16.mxu0 0
      %422 = vmatpush1.bf16.msra.mxu0 0
      %423 = vmatprep.subr.bf16.mxu0 0
      %424 = vmatpush1.bf16.msra.mxu0 0
      %425 = vmatprep.mubr.bf16.mxu0 0
      %426 = vmatmul.mubr.bf16.gmra.mrb[0].mxu0 %v388
      %v427 = vpop.f32.mrb[0].mxu0
      %v428 = vadd.f32 0.0, %v427
      %v429 = vpop.f32.mrb[0].mxu0
      %v430 = vpop.f32.mrb[0].mxu0
      %v431 = vpop.f32.mrb[0].mxu0
      %432 = vdwg.mxu0
      %v433 = vsel %vm368, %v428, 0.0
      %434 = vadd.xlane.f32.xlu0 %v433
      %v435 = vpop.xlane.xlu0 %434
      %v436 = vmul.f32 %v428, %v428
      %v437 = vsel %vm368, %v436, 0.0
      %438 = vadd.xlane.f32.xlu0 %v437
      %v439 = vpop.xlane.xlu0 %438
      %vm440 = vcmask 7168
      %v441 = vsel %vm440, %v435, %v439
      %vm442 = vcmask 11264
      %443 = vst.msk [vmem:[%s225] sm:$0xf] %vm442, %v441
      %v444 = vpack.c.bf16 %v428, %v428
      %445 = vst [vmem:[%s217] sm:$0x3] %v444
      %p446 = scmp.lt.s32.totalorder %s19, 1
      %s447 = scalar_select %p446, %s19, 1
      %p448 = scmp.lt.s32.totalorder %s20, 1
      %s449 = scalar_select %p448, %s20, 1
      %s450 = smul.addr %s447, 2
      %s451 = sadd.s32 %s449, %s450
      %s452 = smul.addr %s451, 2
      %s453 = scalar_lea.vmem %s2, %s452
      %p454 = scmp.lt.s32.totalorder %s19, 1
      %s455 = scalar_select %p454, %s19, 1
      %p456 = scmp.lt.s32.totalorder %s20, 1
      %s457 = scalar_select %p456, %s20, 1
      %s458 = smul.addr %s455, 2
      %s459 = sadd.s32 %s457, %s458
      %s460 = smul.addr %s459, 4
      %s461 = scalar_lea.vmem %s3, %s460
      // Predicated region
      $region29: #{_lambda_.8} parent=27 // pred_check
        %p462 = pneg %p96
      $region30: #{_lambda_.8} parent=27 // pred_check_branch
        %464 = sbr.rel (%p462) target = $region32
      $region31: #{_lambda_.8} parent=27 // pred_region
        _
      $region32: #{_lambda_.8} parent=27 // pred_fallthru
        _
      // Predicated region
      $region33: #{_lambda_.8} parent=27 // pred_check
        %p465 = pneg %p124
      $region34: #{_lambda_.8} parent=27 // pred_check_branch
        %467 = sbr.rel (%p465) target = $region36
      $region35: #{_lambda_.8} parent=27 // pred_region
        _
      $region36: #{_lambda_.8} parent=27 // pred_fallthru
        _
    $region28: #{_lambda_.8} parent=5 // pred_fallthru
      _
    %p468 = scmp.le.s32.totalorder 2, %s10
    // Predicated region
    $region37: #{_lambda_.8} parent=5 // pred_check
      %p469 = pneg %p468
    $region38: #{_lambda_.8} parent=5 // pred_check_branch
      %471 = sbr.rel (%p469) target = $region40
    $region39: #{_lambda_.8} parent=5 // pred_region
      %s472 = ssub.s32 %s10, 2
      // Predicated region
      $region41: #{_lambda_.8} parent=39 // pred_check
        %p473 = pneg %p102
      $region42: #{_lambda_.8} parent=39 // pred_check_branch
        %475 = sbr.rel (%p473) target = $region44
      $region43: #{_lambda_.8} parent=39 // pred_region
        %p476 = scmp.lt.s32.totalorder %s21, 1
        %s477 = scalar_select %p476, %s21, 1
        %p478 = scmp.lt.s32.totalorder %s22, 1
        %s479 = scalar_select %p478, %s22, 1
        %s480 = smul.addr %s477, 2
        %s481 = sadd.s32 %s479, %s480
        %s482 = smul.addr %s481, 2
        %s483 = scalar_lea.vmem %s2, %s482
      $region44: #{_lambda_.8} parent=39 // pred_fallthru
        _
      // Predicated region
      $region45: #{_lambda_.8} parent=39 // pred_check
        %p484 = pneg %p130
      $region46: #{_lambda_.8} parent=39 // pred_check_branch
        %486 = sbr.rel (%p484) target = $region48
      $region47: #{_lambda_.8} parent=39 // pred_region
        %p487 = scmp.lt.s32.totalorder %s21, 1
        %s488 = scalar_select %p487, %s21, 1
        %p489 = scmp.lt.s32.totalorder %s22, 1
        %s490 = scalar_select %p489, %s22, 1
        %s491 = smul.addr %s488, 2
        %s492 = sadd.s32 %s490, %s491
        %s493 = smul.addr %s492, 4
        %s494 = scalar_lea.vmem %s3, %s493
      $region48: #{_lambda_.8} parent=39 // pred_fallthru
        _
    $region40: #{_lambda_.8} parent=5 // pred_fallthru
      _
  $region6: #{_lambda_.8} parent=0 // loop_footer
    %s14 = sadd.s32 1, %s10
  $region7: #{_lambda_.8} parent=0 // loop_footer_branch
    %9 = sbr.rel target = $region3
  $region8: #{_lambda_.8} parent=0 // loop_exit
    _

// kernel: tile.53
$region0: #{tile.53}
  #allocation0 [shape = 's32[1]{0}', space=sflag, size = 0x4, scoped, tag = 'scoped memory for tile.53']
  %s0 = inlined_call_operand.vmem [shape: f32[6], index: 0, kind: input, shape index: {}]
  %s1 = inlined_call_operand.vmem [shape: f32[2,6], index: 1, kind: output, shape index: {}]
  // Predicated region
  $region2: #{tile.53} parent=0 // pred_check
    _
  $region3: #{tile.53} parent=0 // pred_check_branch
    %3 = sbr.rel (0) target = $region5
  $region4: #{tile.53} parent=0 // pred_region
    _
  $region5: #{tile.53} parent=0 // pred_fallthru
    _
  %v4 = vld [vmem:[%s0] ss:$0 sm:$0xff]
  %5 = vst [vmem:[%s1] sm:$0x3] %v4

// kernel: tile.2
$region0: #{tile.2}
  %s0 = inlined_call_operand.vmem [shape: f32[2,6], index: 0, kind: input, shape index: {}]
  %s1 = inlined_call_operand.vmem [shape: f32[12,1], index: 1, kind: output, shape index: {}]
  $region1: #{tile.2} parent=0
    #allocation0 [shape = 'u8[4096]{0}', space=vmem, size = 0x1000, scoped, tag = 'scoped mem for input reshape']
    %s3 = sshllo.u32 0, 2
    %v4 = vld [vmem:[%s0] sm:%s3]
    %5 = vst [vmem:[#allocation0] sm:%s3] %v4
    %v6 = vld [vmem:[#allocation0] sm:$0x3]
    %vm7 = vcmask 7168
    %8 = vst.msk [vmem:[%s1] ss:$6 sm:$0x3] %vm7, %v6
    %v9 = vld [vmem:[#allocation0] sm:$0x3]
    %10 = vrot.lane.b32.xlu0 %v9, 127
    %v11 = vpop.permute.xlu0 %10
    %vm12 = vcmask 7168
    %s13 = scalar_lea.vmem %s1, 1
    %14 = vst.msk [vmem:[%s13] ss:$6 sm:$0x3] %vm12, %v11
    %v15 = vld [vmem:[#allocation0] sm:$0x3]
    %16 = vrot.lane.b32.xlu0 %v15, 126
    %v17 = vpop.permute.xlu0 %16
    %vm18 = vcmask 7168
    %s19 = scalar_lea.vmem %s1, 2
    %20 = vst.msk [vmem:[%s19] ss:$6 sm:$0x3] %vm18, %v17
    %v21 = vld [vmem:[#allocation0] sm:$0x3]
    %22 = vrot.lane.b32.xlu0 %v21, 125
    %v23 = vpop.permute.xlu0 %22
    %vm24 = vcmask 7168
    %s25 = scalar_lea.vmem %s1, 3
    %26 = vst.msk [vmem:[%s25] ss:$6 sm:$0x3] %vm24, %v23
    %v27 = vld [vmem:[#allocation0] sm:$0x3]
    %28 = vrot.lane.b32.xlu0 %v27, 124
    %v29 = vpop.permute.xlu0 %28
    %vm30 = vcmask 7168
    %s31 = scalar_lea.vmem %s1, 4
    %32 = vst.msk [vmem:[%s31] ss:$6 sm:$0x3] %vm30, %v29
    %v33 = vld [vmem:[#allocation0] sm:$0x3]
    %34 = vrot.lane.b32.xlu0 %v33, 123
    %v35 = vpop.permute.xlu0 %34
    %vm36 = vcmask 7168
    %s37 = scalar_lea.vmem %s1, 5
    %38 = vst.msk [vmem:[%s37] ss:$6 sm:$0x3] %vm36, %v35

// kernel: _lambda_.10
$region0: #{_lambda_.10}
  #allocation0 [shape = 'u32[]', space=smem, size = 0x4, offset = 0x4, fixed_abs, tag = 'smem constant byte address 0x4 - core index']
  #allocation1 [shape = 'u32[144,128]{1,0:T(1,128)}', space=vmem, size = 0x12000, scoped, tag = 'internal scratch']
  %s0 = inlined_call_operand.vmem [shape: bf16[2,2,16,162], index: 0, kind: input, shape index: {}]
  %s1 = inlined_call_operand.vmem [shape: bf16[6,144], index: 1, kind: input, shape index: {}]
  %s2 = inlined_call_operand.vmem [shape: bf16[2,6,256], index: 2, kind: output, shape index: {0}]
  %s3 = inlined_call_operand.vmem [shape: f32[2,2,6,2], index: 3, kind: output, shape index: {1}]
  %4 = xla_tuple %s2, %s3
  %s5 = sld [smem:[#allocation0]]
  $region49: #{_lambda_.10} parent=0
    _
  %s7 = ssub.s32 1, %s5
  %s8 = scalar_select 0, %s7, %s5
  loop: start=0, step=1, limit=6
  $region2: #{_lambda_.10} parent=0 // loop_pre_header
    _
  $region3: #{_lambda_.10} parent=0 // loop_header
    %s10 = sphi 0, %s14
    %p11 = scmp.ge.s32.totalorder %s10, 6
    %s17 = sphi 0, %s29
    %s18 = sphi 0, %s25
    %s19 = sphi 0, %s17
    %s20 = sphi 0, %s18
    %s21 = sphi 0, %s19
    %s22 = sphi 0, %s20
    %s34 = sphi 0, %s36
    %s37 = sphi 0, %s34
    %s38 = sphi 0, %s37
    %s54 = sphi 0, %s38
    %s58 = sphi 0, %s58
    %s60 = sphi 0, %s58
    %s61 = sphi 0, %s60
    %s75 = sphi 0, %s61
    %s83 = sphi 0, %s85
    %s86 = sphi 0, %s83
    %s87 = sphi 0, %s86
    %s103 = sphi 0, %s87
    %s111 = sphi 0, %s113
    %s114 = sphi 0, %s111
    %s115 = sphi 0, %s114
    %s131 = sphi 0, %s115
  $region4: #{_lambda_.10} parent=0 // loop_header_branch
    %13 = sbr.rel (%p11) target = $region8
  $region5: #{_lambda_.10} parent=0 // loop_body
    %s15 = ssub.s32 %s10, 1
    %s16 = ssub.s32 %s10, 2
    %s23 = sadd.s32 1, %s18
    %p24 = scmp.ge.s32.totalorder %s23, 2
    %s25 = scalar_select %p24, 0, %s23
    %s26 = sadd.s32 1, %s17
    %s27 = scalar_select %p24, %s26, %s17
    %p28 = scmp.ge.s32.totalorder %s27, 2
    %s29 = scalar_select %p28, 0, %s27
    %s30 = ssub.s32 %s17, %s29
    %s31 = ssub.s32 %s18, %s25
    %s32 = sor.u32 %s30, %s31
    %p33 = scmp.eq.s32.totalorder %s32, 0
    %s35 = sadd.s32 %s34, 1
    %s36 = scalar_select %p33, %s34, %s35
    %p39 = pneg %p33
    %p40 = scmp.eq.s32.totalorder %s10, 3
    %p41 = por %p39, %p40
    %p42 = scmp.ne.s32.totalorder %s34, %s37
    %p43 = scmp.eq.s32.totalorder %s10, 0
    %p44 = por %p42, %p43
    %p45 = scmp.ne.s32.totalorder %s34, %s37
    %p46 = scmp.eq.s32.totalorder %s15, 3
    %p47 = por %p45, %p46
    %p48 = scmp.ne.s32.totalorder %s37, %s38
    %p49 = scmp.eq.s32.totalorder %s15, 0
    %p50 = por %p48, %p49
    %p51 = scmp.ne.s32.totalorder %s37, %s38
    %p52 = scmp.eq.s32.totalorder %s16, 3
    %p53 = por %p51, %p52
    %p55 = scmp.ne.s32.totalorder %s38, %s54
    %p56 = scmp.eq.s32.totalorder %s16, 0
    %p57 = por %p55, %p56
    %s59 = sadd.s32 %s58, 1
    %p62 = scmp.eq.s32.totalorder %s10, 3
    %p63 = scmp.ne.s32.totalorder %s58, %s60
    %p64 = scmp.eq.s32.totalorder %s10, 0
    %p65 = por %p63, %p64
    %p66 = scmp.ne.s32.totalorder %s58, %s60
    %p67 = scmp.eq.s32.totalorder %s15, 3
    %p68 = por %p66, %p67
    %p69 = scmp.ne.s32.totalorder %s60, %s61
    %p70 = scmp.eq.s32.totalorder %s15, 0
    %p71 = por %p69, %p70
    %p72 = scmp.ne.s32.totalorder %s60, %s61
    %p73 = scmp.eq.s32.totalorder %s16, 3
    %p74 = por %p72, %p73
    %p76 = scmp.ne.s32.totalorder %s61, %s75
    %p77 = scmp.eq.s32.totalorder %s16, 0
    %p78 = por %p76, %p77
    %s79 = ssub.s32 %s17, %s29
    %s80 = ssub.s32 %s18, %s25
    %s81 = sor.u32 %s79, %s80
    %p82 = scmp.eq.s32.totalorder %s81, 0
    %s84 = sadd.s32 %s83, 1
    %s85 = scalar_select %p82, %s83, %s84
    %p88 = pneg %p82
    %p89 = scmp.eq.s32.totalorder %s10, 3
    %p90 = por %p88, %p89
    %p91 = scmp.ne.s32.totalorder %s83, %s86
    %p92 = scmp.eq.s32.totalorder %s10, 0
    %p93 = por %p91, %p92
    %p94 = scmp.ne.s32.totalorder %s83, %s86
    %p95 = scmp.eq.s32.totalorder %s15, 3
    %p96 = por %p94, %p95
    %p97 = scmp.ne.s32.totalorder %s86, %s87
    %p98 = scmp.eq.s32.totalorder %s15, 0
    %p99 = por %p97, %p98
    %p100 = scmp.ne.s32.totalorder %s86, %s87
    %p101 = scmp.eq.s32.totalorder %s16, 3
    %p102 = por %p100, %p101
    %p104 = scmp.ne.s32.totalorder %s87, %s103
    %p105 = scmp.eq.s32.totalorder %s16, 0
    %p106 = por %p104, %p105
    %s107 = ssub.s32 %s17, %s29
    %s108 = ssub.s32 %s18, %s25
    %s109 = sor.u32 %s107, %s108
    %p110 = scmp.eq.s32.totalorder %s109, 0
    %s112 = sadd.s32 %s111, 1
    %s113 = scalar_select %p110, %s111, %s112
    %p116 = pneg %p110
    %p117 = scmp.eq.s32.totalorder %s10, 3
    %p118 = por %p116, %p117
    %p119 = scmp.ne.s32.totalorder %s111, %s114
    %p120 = scmp.eq.s32.totalorder %s10, 0
    %p121 = por %p119, %p120
    %p122 = scmp.ne.s32.totalorder %s111, %s114
    %p123 = scmp.eq.s32.totalorder %s15, 3
    %p124 = por %p122, %p123
    %p125 = scmp.ne.s32.totalorder %s114, %s115
    %p126 = scmp.eq.s32.totalorder %s15, 0
    %p127 = por %p125, %p126
    %p128 = scmp.ne.s32.totalorder %s114, %s115
    %p129 = scmp.eq.s32.totalorder %s16, 3
    %p130 = por %p128, %p129
    %p132 = scmp.ne.s32.totalorder %s115, %s131
    %p133 = scmp.eq.s32.totalorder %s16, 0
    %p134 = por %p132, %p133
    %p135 = scmp.le.s32.totalorder 1, %s10
    %p136 = scmp.lt.s32.totalorder %s10, 5
    %p137 = pnand %p135, %p136
    %p138 = pneg %p137
    // Predicated region
    $region9: #{_lambda_.10} parent=5 // pred_check
      _
    $region10: #{_lambda_.10} parent=5 // pred_check_branch
      %140 = sbr.rel (%p137) target = $region12
    $region11: #{_lambda_.10} parent=5 // pred_region
      %s141 = ssub.s32 %s10, 1
      // Predicated region
      $region13: #{_lambda_.10} parent=11 // pred_check
        %p142 = pneg %p71
      $region14: #{_lambda_.10} parent=11 // pred_check_branch
        %144 = sbr.rel (%p142) target = $region16
      $region15: #{_lambda_.10} parent=11 // pred_region
        _
      $region16: #{_lambda_.10} parent=11 // pred_fallthru
        _
    $region12: #{_lambda_.10} parent=5 // pred_fallthru
      _
    %p145 = scmp.lt.s32.totalorder %s10, 4
    // Predicated region
    $region17: #{_lambda_.10} parent=5 // pred_check
      %p146 = pneg %p145
    $region18: #{_lambda_.10} parent=5 // pred_check_branch
      %148 = sbr.rel (%p146) target = $region20
    $region19: #{_lambda_.10} parent=5 // pred_region
      // Predicated region
      $region21: #{_lambda_.10} parent=19 // pred_check
        %p149 = pneg %p44
      $region22: #{_lambda_.10} parent=19 // pred_check_branch
        %151 = sbr.rel (%p149) target = $region24
      $region23: #{_lambda_.10} parent=19 // pred_region
        %p152 = scmp.lt.s32.totalorder %s17, 1
        %s153 = scalar_select %p152, %s17, 1
        %p154 = scmp.lt.s32.totalorder %s18, 1
        %s155 = scalar_select %p154, %s18, 1
        %s156 = smul.addr %s155, 4
        %s157 = smul.addr %s153, 8
        %s158 = sadd.s32 %s156, %s157
        %s159 = smul.addr %s158, 4
        %s160 = scalar_lea.vmem %s0, %s159
      $region24: #{_lambda_.10} parent=19 // pred_fallthru
        _
    $region20: #{_lambda_.10} parent=5 // pred_fallthru
      _
    %p161 = scmp.le.s32.totalorder 1, %s10
    %p162 = scmp.lt.s32.totalorder %s10, 5
    %p163 = pnand %p161, %p162
    %p164 = pneg %p163
    // Predicated region
    $region25: #{_lambda_.10} parent=5 // pred_check
      _
    $region26: #{_lambda_.10} parent=5 // pred_check_branch
      %166 = sbr.rel (%p163) target = $region28
    $region27: #{_lambda_.10} parent=5 // pred_region
      %s167 = ssub.s32 %s10, 1
      %p168 = scmp.lt.s32.totalorder %s19, 1
      %s169 = scalar_select %p168, %s19, 1
      %p170 = scmp.lt.s32.totalorder %s20, 1
      %s171 = scalar_select %p170, %s20, 1
      %s172 = smul.addr %s171, 4
      %s173 = smul.addr %s169, 8
      %s174 = sadd.s32 %s172, %s173
      %s175 = smul.addr %s174, 4
      %s176 = scalar_lea.vmem %s0, %s175
      %p177 = pneg %p50
      %p178 = pneg %p47
      %p179 = pneg %p71
      %p180 = pneg %p68
      %p181 = pneg %p99
      %p182 = pneg %p96
      %p183 = scmp.lt.s32.totalorder %s19, 1
      %s184 = scalar_select %p183, %s19, 1
      %p185 = scmp.lt.s32.totalorder %s20, 1
      %s186 = scalar_select %p185, %s20, 1
      %s187 = smul.addr %s184, 2
      %s188 = sadd.s32 %s186, %s187
      %s189 = smul.addr %s188, 4
      %s190 = scalar_lea.vmem %s2, %s189
      %p191 = pneg %p127
      %p192 = pneg %p124
      %p193 = scmp.lt.s32.totalorder %s19, 1
      %s194 = scalar_select %p193, %s19, 1
      %p195 = scmp.lt.s32.totalorder %s20, 1
      %s196 = scalar_select %p195, %s20, 1
      %s197 = smul.addr %s194, 2
      %s198 = sadd.s32 %s196, %s197
      %s199 = smul.addr %s198, 8
      %s200 = scalar_lea.vmem %s3, %s199
      %p201 = scmp.lt.s32.totalorder %s19, 1
      %s202 = scalar_select %p201, %s19, 1
      %p203 = scmp.lt.s32.totalorder %s20, 1
      %s204 = scalar_select %p203, %s20, 1
      %s205 = smul.addr %s204, 4
      %s206 = smul.addr %s202, 8
      %s207 = sadd.s32 %s205, %s206
      %s208 = smul.addr %s207, 4
      %s209 = scalar_lea.vmem %s0, %s208
      %p210 = scmp.lt.s32.totalorder %s19, 1
      %s211 = scalar_select %p210, %s19, 1
      %p212 = scmp.lt.s32.totalorder %s20, 1
      %s213 = scalar_select %p212, %s20, 1
      %s214 = smul.addr %s211, 2
      %s215 = sadd.s32 %s213, %s214
      %s216 = smul.addr %s215, 4
      %s217 = scalar_lea.vmem %s2, %s216
      %p218 = scmp.lt.s32.totalorder %s19, 1
      %s219 = scalar_select %p218, %s19, 1
      %p220 = scmp.lt.s32.totalorder %s20, 1
      %s221 = scalar_select %p220, %s20, 1
      %s222 = smul.addr %s219, 2
      %s223 = sadd.s32 %s221, %s222
      %s224 = smul.addr %s223, 8
      %s225 = scalar_lea.vmem %s3, %s224
      %v229 = vld [vmem:[%s209] sm:$0xff]
      %v230 = vld [vmem:[%s209 + $0x8] sm:$0xff]
      %v231 = vlaneseq
      %v232 = vand.u32 %v231, 127
      %vm233 = vcmp.lt.s32.totalorder %v232, 0
      %v234 = vsub.s32 0, %v232
      %v235 = vsel %vm233, %v234, %v232
      %v236 = vshrl.u32 %v235, 4
      %v237 = vand.u32 %v235, 15
      %v238 = vsub.s32 0, %v237
      %v239 = vsel %vm233, %v238, %v237
      %vm240 = vcmp.ne.s32.totalorder %v239, 0
      %vm241 = vcmp.lt.s32.totalorder %v239, 0
      %vm242 = vmand %vm241, %vm240
      %v243 = vadd.s32 %v239, 16
      %v244 = vsel %vm242, %v243, %v239
      %vm245 = vcmp.ne.s32.totalorder %v244, 0
      %vm246 = vcmp.ne.s32.totalorder %v244, 15
      %v247 = vsel %vm245, 1, 0
      %vm248 = vcmp.eq.s32.totalorder %v247, 1
      %vm249 = vmpackc.low %vm248, %vm248
      %v250 = vsel %vm249, %v229, 0
      %v251 = vsel %vm249, %v230, 0
      %v252 = vsel %vm246, 1, 0
      %vm253 = vcmp.eq.s32.totalorder %v252, 1
      %vm254 = vmpackc.low %vm253, %vm253
      %v255 = vsel %vm254, 65537, 0
      %256 = vrot.lane.b32.xlu0 %v255, 2
      %v257 = vpop.permute.xlu0 %256
      %v258 = vrot.slane %v257, 4
      %vm259 = vcmask 15360
      %v260 = vsel %vm259, %v258, %v257
      %vm261 = vcmp.ne.s16.totalorder %v260, 0
      %v262 = vsel %vm261, %v229, 0
      %v263 = vsel %vm261, %v230, 0
      %v264 = vsel %vm249, 65537, 0
      %265 = vrot.lane.b32.xlu0 %v264, 16
      %v266 = vpop.permute.xlu0 %265
      %v267 = vrot.slane %v266, 4
      %vm268 = vcmask 130048
      %v269 = vsel %vm268, %v267, %v266
      %vm270 = vcmp.ne.s16.totalorder %v269, 0
      %v271 = vsel %vm270, %v229, 0
      %v272 = vsel %vm270, %v230, 0
      %273 = vrot.lane.b32.xlu0 %v255, 18
      %v274 = vpop.permute.xlu0 %273
      %v275 = vrot.slane %v274, 4
      %vm276 = vcmask 146432
      %v277 = vsel %vm276, %v275, %v274
      %vm278 = vcmp.ne.s16.totalorder %v277, 0
      %v279 = vsel %vm278, %v229, 0
      %v280 = vsel %vm278, %v230, 0
      %281 = vrot.lane.b32.xlu0 %v264, 32
      %v282 = vpop.permute.xlu0 %281
      %v283 = vrot.slane %v282, 4
      %vm284 = vcmask 261120
      %v285 = vsel %vm284, %v283, %v282
      %vm286 = vcmp.ne.s16.totalorder %v285, 0
      %v287 = vsel %vm286, %v229, 0
      %v288 = vsel %vm286, %v230, 0
      %289 = vrot.lane.b32.xlu0 %v255, 34
      %v290 = vpop.permute.xlu0 %289
      %v291 = vrot.slane %v290, 4
      %vm292 = vcmask 277504
      %v293 = vsel %vm292, %v291, %v290
      %vm294 = vcmp.ne.s16.totalorder %v293, 0
      %v295 = vsel %vm294, %v229, 0
      %v296 = vsel %vm294, %v230, 0
      %v299 = vunpack.c.l.b16 %v250
      %v300 = vunpack.c.l.b16 %v251
      %v301 = vpack.c.b16 %v300, %v299
      %v305 = vunpack.c.l.b16 %v229
      %v306 = vunpack.c.h.b16 %v229
      %v307 = vunpack.c.l.b16 %v230
      %v308 = vunpack.c.h.b16 %v230
      %v309 = vpack.c.b16 %v307, %v305
      %v310 = vpack.c.b16 %v308, %v306
      %311 = vrot.lane.b32.xlu0 %v309, 127
      %v312 = vpop.permute.xlu0 %311
      %313 = vrot.lane.b32.xlu0 %v310, 127
      %v314 = vpop.permute.xlu0 %313
      %vm315 = vcmask 1039360
      %v316 = vsel %vm315, %v312, %v314
      %v320 = vunpack.c.l.b16 %v262
      %v321 = vunpack.c.h.b16 %v262
      %v322 = vunpack.c.l.b16 %v263
      %v323 = vunpack.c.h.b16 %v263
      %v324 = vpack.c.b16 %v322, %v320
      %v325 = vpack.c.b16 %v323, %v321
      %326 = vrot.lane.b32.xlu0 %v324, 126
      %v327 = vpop.permute.xlu0 %326
      %328 = vrot.lane.b32.xlu0 %v325, 126
      %v329 = vpop.permute.xlu0 %328
      %vm330 = vcmask 1031168
      %v331 = vsel %vm330, %v327, %v329
      %v335 = vunpack.c.l.b16 %v271
      %v336 = vunpack.c.h.b16 %v271
      %v337 = vunpack.c.l.b16 %v272
      %v338 = vunpack.c.h.b16 %v272
      %v339 = vpack.c.b16 %v337, %v335
      %v340 = vpack.c.b16 %v338, %v336
      %341 = vrot.lane.b32.xlu0 %v339, 112
      %v342 = vpop.permute.xlu0 %341
      %343 = vrot.lane.b32.xlu0 %v340, 112
      %v344 = vpop.permute.xlu0 %343
      %vm345 = vcmask 916480
      %v346 = vsel %vm345, %v342, %v344
      %348 = vrot.lane.b32.xlu0 %v309, 111
      %v349 = vpop.permute.xlu0 %348
      %350 = vrot.lane.b32.xlu0 %v310, 111
      %v351 = vpop.permute.xlu0 %350
      %vm352 = vcmask 908288
      %v353 = vsel %vm352, %v349, %v351
      %v357 = vunpack.c.l.b16 %v279
      %v358 = vunpack.c.h.b16 %v279
      %v359 = vunpack.c.l.b16 %v280
      %v360 = vunpack.c.h.b16 %v280
      %v361 = vpack.c.b16 %v359, %v357
      %v362 = vpack.c.b16 %v360, %v358
      %363 = vrot.lane.b32.xlu0 %v361, 110
      %v364 = vpop.permute.xlu0 %363
      %365 = vrot.lane.b32.xlu0 %v362, 110
      %v366 = vpop.permute.xlu0 %365
      %vm367 = vcmask 900096
      %v368 = vsel %vm367, %v364, %v366
      %v372 = vunpack.c.l.b16 %v287
      %v373 = vunpack.c.h.b16 %v287
      %v374 = vunpack.c.l.b16 %v288
      %v375 = vunpack.c.h.b16 %v288
      %v376 = vpack.c.b16 %v374, %v372
      %v377 = vpack.c.b16 %v375, %v373
      %378 = vrot.lane.b32.xlu0 %v376, 96
      %v379 = vpop.permute.xlu0 %378
      %380 = vrot.lane.b32.xlu0 %v377, 96
      %v381 = vpop.permute.xlu0 %380
      %vm382 = vcmask 785408
      %v383 = vsel %vm382, %v379, %v381
      %385 = vrot.lane.b32.xlu0 %v309, 95
      %v386 = vpop.permute.xlu0 %385
      %387 = vrot.lane.b32.xlu0 %v310, 95
      %v388 = vpop.permute.xlu0 %387
      %vm389 = vcmask 777216
      %v390 = vsel %vm389, %v386, %v388
      %v394 = vunpack.c.l.b16 %v295
      %v395 = vunpack.c.h.b16 %v295
      %v396 = vunpack.c.l.b16 %v296
      %v397 = vunpack.c.h.b16 %v296
      %v398 = vpack.c.b16 %v396, %v394
      %v399 = vpack.c.b16 %v397, %v395
      %400 = vrot.lane.b32.xlu0 %v398, 94
      %v401 = vpop.permute.xlu0 %400
      %402 = vrot.lane.b32.xlu0 %v399, 94
      %v403 = vpop.permute.xlu0 %402
      %vm404 = vcmask 769024
      %v405 = vsel %vm404, %v401, %v403
      %v407 = vld [vmem:[%s1] sm:$0x77]
      %v409 = vunpack.c.l.b16 %v407
      %v410 = vunpack.c.h.b16 %v407
      %v411 = vpack.c.b16 %v409, %v409
      %v412 = vpack.c.b16 %v410, %v410
      %vm414 = vcmask 130048
      %v416 = vsel %vm414, %v412, 0
      %418 = vmatprep.subr.bf16.mxu0 0
      %419 = vmatpush1.bf16.msra.mxu0 %v301
      %420 = vmatprep.subr.bf16.mxu0 0
      %421 = vmatpush1.bf16.msra.mxu0 %v316
      %422 = vmatprep.subr.bf16.mxu0 0
      %423 = vmatpush1.bf16.msra.mxu0 %v331
      %424 = vmatprep.subr.bf16.mxu0 0
      %425 = vmatpush1.bf16.msra.mxu0 %v346
      %426 = vmatprep.subr.bf16.mxu0 0
      %427 = vmatpush1.bf16.msra.mxu0 %v353
      %428 = vmatprep.subr.bf16.mxu0 0
      %429 = vmatpush1.bf16.msra.mxu0 %v368
      %430 = vmatprep.subr.bf16.mxu0 0
      %431 = vmatpush1.bf16.msra.mxu0 %v383
      %432 = vmatprep.subr.bf16.mxu0 0
      %433 = vmatpush1.bf16.msra.mxu0 %v390
      %434 = vmatprep.subr.bf16.mxu0 0
      %435 = vmatpush1.bf16.msra.mxu0 %v405
      %436 = vmatprep.subr.bf16.mxu0 0
      %437 = vmatpush1.bf16.msra.mxu0 0
      %438 = vmatprep.subr.bf16.mxu0 0
      %439 = vmatpush1.bf16.msra.mxu0 0
      %440 = vmatprep.subr.bf16.mxu0 0
      %441 = vmatpush1.bf16.msra.mxu0 0
      %442 = vmatprep.subr.bf16.mxu0 0
      %443 = vmatpush1.bf16.msra.mxu0 0
      %444 = vmatprep.subr.bf16.mxu0 0
      %445 = vmatpush1.bf16.msra.mxu0 0
      %446 = vmatprep.subr.bf16.mxu0 0
      %447 = vmatpush1.bf16.msra.mxu0 0
      %448 = vmatprep.subr.bf16.mxu0 0
      %449 = vmatpush1.bf16.msra.mxu0 0
      %450 = vmatprep.mubr.bf16.mxu0 %v416
      %451 = vmatmul.mubr.bf16.gmra.mrb[0].mxu0 %v411
      %v452 = vpop.f32.mrb[0].mxu0
      %v453 = vadd.f32 0.0, %v452
      %v454 = vpop.f32.mrb[0].mxu0
      %v455 = vpop.f32.mrb[0].mxu0
      %v456 = vpop.f32.mrb[0].mxu0
      %457 = vdwg.mxu0
      %vm458 = vcmask 1045504
      %v459 = vsel %vm458, %v453, 0.0
      %460 = vadd.xlane.f32.xlu0 %v459
      %v461 = vpop.xlane.xlu0 %460
      %v462 = vmul.f32 %v453, %v453
      %v463 = vsel %vm458, %v462, 0.0
      %464 = vadd.xlane.f32.xlu0 %v463
      %v465 = vpop.xlane.xlu0 %464
      %vm466 = vcmask 7168
      %v467 = vsel %vm466, %v461, %v465
      %vm468 = vcmask 13312
      %469 = vst.msk [vmem:[%s225] sm:$0x3f] %vm468, %v467
      %v470 = vpack.c.bf16 %v453, %v453
      %471 = vst [vmem:[%s217] sm:$0x7] %v470
      %p472 = scmp.lt.s32.totalorder %s19, 1
      %s473 = scalar_select %p472, %s19, 1
      %p474 = scmp.lt.s32.totalorder %s20, 1
      %s475 = scalar_select %p474, %s20, 1
      %s476 = smul.addr %s473, 2
      %s477 = sadd.s32 %s475, %s476
      %s478 = smul.addr %s477, 4
      %s479 = scalar_lea.vmem %s2, %s478
      %p480 = scmp.lt.s32.totalorder %s19, 1
      %s481 = scalar_select %p480, %s19, 1
      %p482 = scmp.lt.s32.totalorder %s20, 1
      %s483 = scalar_select %p482, %s20, 1
      %s484 = smul.addr %s481, 2
      %s485 = sadd.s32 %s483, %s484
      %s486 = smul.addr %s485, 8
      %s487 = scalar_lea.vmem %s3, %s486
      // Predicated region
      $region29: #{_lambda_.10} parent=27 // pred_check
        %p488 = pneg %p96
      $region30: #{_lambda_.10} parent=27 // pred_check_branch
        %490 = sbr.rel (%p488) target = $region32
      $region31: #{_lambda_.10} parent=27 // pred_region
        _
      $region32: #{_lambda_.10} parent=27 // pred_fallthru
        _
      // Predicated region
      $region33: #{_lambda_.10} parent=27 // pred_check
        %p491 = pneg %p124
      $region34: #{_lambda_.10} parent=27 // pred_check_branch
        %493 = sbr.rel (%p491) target = $region36
      $region35: #{_lambda_.10} parent=27 // pred_region
        _
      $region36: #{_lambda_.10} parent=27 // pred_fallthru
        _
    $region28: #{_lambda_.10} parent=5 // pred_fallthru
      _
    %p494 = scmp.le.s32.totalorder 2, %s10
    // Predicated region
    $region37: #{_lambda_.10} parent=5 // pred_check
      %p495 = pneg %p494
    $region38: #{_lambda_.10} parent=5 // pred_check_branch
      %497 = sbr.rel (%p495) target = $region40
    $region39: #{_lambda_.10} parent=5 // pred_region
      %s498 = ssub.s32 %s10, 2
      // Predicated region
      $region41: #{_lambda_.10} parent=39 // pred_check
        %p499 = pneg %p102
      $region42: #{_lambda_.10} parent=39 // pred_check_branch
        %501 = sbr.rel (%p499) target = $region44
      $region43: #{_lambda_.10} parent=39 // pred_region
        %p502 = scmp.lt.s32.totalorder %s21, 1
        %s503 = scalar_select %p502, %s21, 1
        %p504 = scmp.lt.s32.totalorder %s22, 1
        %s505 = scalar_select %p504, %s22, 1
        %s506 = smul.addr %s503, 2
        %s507 = sadd.s32 %s505, %s506
        %s508 = smul.addr %s507, 4
        %s509 = scalar_lea.vmem %s2, %s508
      $region44: #{_lambda_.10} parent=39 // pred_fallthru
        _
      // Predicated region
      $region45: #{_lambda_.10} parent=39 // pred_check
        %p510 = pneg %p130
      $region46: #{_lambda_.10} parent=39 // pred_check_branch
        %512 = sbr.rel (%p510) target = $region48
      $region47: #{_lambda_.10} parent=39 // pred_region
        %p513 = scmp.lt.s32.totalorder %s21, 1
        %s514 = scalar_select %p513, %s21, 1
        %p515 = scmp.lt.s32.totalorder %s22, 1
        %s516 = scalar_select %p515, %s22, 1
        %s517 = smul.addr %s514, 2
        %s518 = sadd.s32 %s516, %s517
        %s519 = smul.addr %s518, 8
        %s520 = scalar_lea.vmem %s3, %s519
      $region48: #{_lambda_.10} parent=39 // pred_fallthru
        _
    $region40: #{_lambda_.10} parent=5 // pred_fallthru
      _
  $region6: #{_lambda_.10} parent=0 // loop_footer
    %s14 = sadd.s32 1, %s10
  $region7: #{_lambda_.10} parent=0 // loop_footer_branch
    %9 = sbr.rel target = $region3
  $region8: #{_lambda_.10} parent=0 // loop_exit
    _

// kernel: _lambda_.11
$region0: #{_lambda_.11}
  #allocation0 [shape = 'u32[]', space=smem, size = 0x4, offset = 0x4, fixed_abs, tag = 'smem constant byte address 0x4 - core index']
  #allocation1 [shape = 'u32[144,128]{1,0:T(1,128)}', space=vmem, size = 0x12000, scoped, tag = 'internal scratch']
  %s0 = inlined_call_operand.vmem [shape: bf16[12,256], index: 0, kind: input, shape index: {}]
  %s1 = inlined_call_operand.vmem [shape: f32[12,1], index: 1, kind: input, shape index: {}]
  %s2 = inlined_call_operand.vmem [shape: f32[12,1], index: 2, kind: input, shape index: {}]
  %s3 = inlined_call_operand.vmem [shape: bf16[12,256], index: 3, kind: output, shape index: {}]
  %s4 = sld [smem:[#allocation0]]
  $region22: #{_lambda_.11} parent=0
    _
  %s6 = ssub.s32 1, %s4
  %s7 = scalar_select 0, %s6, %s4
  // Predicated region
  $region2: #{_lambda_.11} parent=0 // pred_check
    _
  $region3: #{_lambda_.11} parent=0 // pred_check_branch
    %9 = sbr.rel (0) target = $region5
  $region4: #{_lambda_.11} parent=0 // pred_region
    _
  $region5: #{_lambda_.11} parent=0 // pred_fallthru
    _
  // Predicated region
  $region6: #{_lambda_.11} parent=0 // pred_check
    _
  $region7: #{_lambda_.11} parent=0 // pred_check_branch
    %11 = sbr.rel (0) target = $region9
  $region8: #{_lambda_.11} parent=0 // pred_region
    _
  $region9: #{_lambda_.11} parent=0 // pred_fallthru
    _
  // Predicated region
  $region10: #{_lambda_.11} parent=0 // pred_check
    _
  $region11: #{_lambda_.11} parent=0 // pred_check_branch
    %13 = sbr.rel (0) target = $region13
  $region12: #{_lambda_.11} parent=0 // pred_region
    _
  $region13: #{_lambda_.11} parent=0 // pred_fallthru
    _
  %v14 = vld [vmem:[%s0] sm:$0xff]
  %v15 = vld [vmem:[%s0 + $0x8] sm:$0x33]
  %v16 = vunpack.c.l.bf16 %v14
  %v17 = vunpack.c.h.bf16 %v14
  %v18 = vunpack.c.l.bf16 %v15
  %v19 = vunpack.c.h.bf16 %v15
  %v20 = vld [vmem:[%s1] sm:$0xff]
  %v21 = vld [vmem:[%s1 + $0x8] sm:$0xf]
  %23 = vset.pattern.permute.xlu0 0
  %24 = vperm.xlu0 %23, %v20
  %v25 = vpop.permute.xlu0 %24
  %28 = vset.pattern.permute.xlu0 0
  %29 = vperm.xlu0 %28, %v21
  %v30 = vpop.permute.xlu0 %29
  %v32 = vmul.f32 %v16, %v25
  %v33 = vmul.f32 %v17, %v25
  %v34 = vmul.f32 %v18, %v30
  %v35 = vmul.f32 %v19, %v30
  %v36 = vld [vmem:[%s2] sm:$0xff]
  %v37 = vld [vmem:[%s2 + $0x8] sm:$0xf]
  %39 = vset.pattern.permute.xlu0 0
  %40 = vperm.xlu0 %39, %v36
  %v41 = vpop.permute.xlu0 %40
  %44 = vset.pattern.permute.xlu0 0
  %45 = vperm.xlu0 %44, %v37
  %v46 = vpop.permute.xlu0 %45
  %v48 = vadd.f32 %v32, %v41
  %v49 = vadd.f32 %v33, %v41
  %v50 = vadd.f32 %v34, %v46
  %v51 = vadd.f32 %v35, %v46
  %v52 = vmax.f32 %v48, 0.0
  %v53 = vmax.f32 %v49, 0.0
  %v54 = vmax.f32 %v50, 0.0
  %v55 = vmax.f32 %v51, 0.0
  %v56 = vpack.c.bf16 %v54, %v52
  %v57 = vpack.c.bf16 %v55, %v53
  %v60 = vunpack.c.l.b16 %v56
  %v61 = vunpack.c.l.b16 %v57
  %v62 = vunpack.c.h.b16 %v56
  %v63 = vunpack.c.h.b16 %v57
  %v64 = vpack.c.b16 %v61, %v60
  %v65 = vpack.c.b16 %v63, %v62
  %68 = vst [vmem:[%s3] sm:$0xff] %v64
  %69 = vst [vmem:[%s3 + $0x8] sm:$0x33] %v65
  // Predicated region
  $region14: #{_lambda_.11} parent=0 // pred_check
    _
  $region15: #{_lambda_.11} parent=0 // pred_check_branch
    %71 = sbr.rel (0) target = $region17
  $region16: #{_lambda_.11} parent=0 // pred_region
    _
  $region17: #{_lambda_.11} parent=0 // pred_fallthru
    _
  // Predicated region
  $region18: #{_lambda_.11} parent=0 // pred_check
    _
  $region19: #{_lambda_.11} parent=0 // pred_check_branch
    %73 = sbr.rel (0) target = $region21
  $region20: #{_lambda_.11} parent=0 // pred_region
    _
  $region21: #{_lambda_.11} parent=0 // pred_fallthru
    _

// kernel: tile.73
$region0: #{tile.73}
  #allocation0 [shape = 's32[1]{0}', space=sflag, size = 0x4, scoped, tag = 'scoped memory for tile.73']
  %s0 = inlined_call_operand.vmem [shape: f32[12], index: 0, kind: input, shape index: {}]
  %s1 = inlined_call_operand.vmem [shape: f32[2,12], index: 1, kind: output, shape index: {}]
  // Predicated region
  $region2: #{tile.73} parent=0 // pred_check
    _
  $region3: #{tile.73} parent=0 // pred_check_branch
    %3 = sbr.rel (0) target = $region5
  $region4: #{tile.73} parent=0 // pred_region
    _
  $region5: #{tile.73} parent=0 // pred_fallthru
    _
  %v4 = vld [vmem:[%s0] ss:$0 sm:$0xff]
  %5 = vst [vmem:[%s1] sm:$0x3] %v4

// kernel: tile.6
$region0: #{tile.6}
  %s0 = inlined_call_operand.vmem [shape: f32[2,12], index: 0, kind: input, shape index: {}]
  %s1 = inlined_call_operand.vmem [shape: f32[24,1], index: 1, kind: output, shape index: {}]
  $region1: #{tile.6} parent=0
    #allocation0 [shape = 'u8[4096]{0}', space=vmem, size = 0x1000, scoped, tag = 'scoped mem for input reshape']
    %s3 = sshllo.u32 0, 2
    %v4 = vld [vmem:[%s0] sm:%s3]
    %5 = vst [vmem:[#allocation0] sm:%s3] %v4
    %v6 = vld [vmem:[#allocation0] sm:$0x3]
    %vm7 = vcmask 7168
    %8 = vst.msk [vmem:[%s1] ss:$12 sm:$0x3] %vm7, %v6
    %v9 = vld [vmem:[#allocation0] sm:$0x3]
    %10 = vrot.lane.b32.xlu0 %v9, 127
    %v11 = vpop.permute.xlu0 %10
    %vm12 = vcmask 7168
    %s13 = scalar_lea.vmem %s1, 1
    %14 = vst.msk [vmem:[%s13] ss:$12 sm:$0x3] %vm12, %v11
    %v15 = vld [vmem:[#allocation0] sm:$0x3]
    %16 = vrot.lane.b32.xlu0 %v15, 126
    %v17 = vpop.permute.xlu0 %16
    %vm18 = vcmask 7168
    %s19 = scalar_lea.vmem %s1, 2
    %20 = vst.msk [vmem:[%s19] ss:$12 sm:$0x3] %vm18, %v17
    %v21 = vld [vmem:[#allocation0] sm:$0x3]
    %22 = vrot.lane.b32.xlu0 %v21, 125
    %v23 = vpop.permute.xlu0 %22
    %vm24 = vcmask 7168
    %s25 = scalar_lea.vmem %s1, 3
    %26 = vst.msk [vmem:[%s25] ss:$12 sm:$0x3] %vm24, %v23
    %v27 = vld [vmem:[#allocation0] sm:$0x3]
    %28 = vrot.lane.b32.xlu0 %v27, 124
    %v29 = vpop.permute.xlu0 %28
    %vm30 = vcmask 7168
    %s31 = scalar_lea.vmem %s1, 4
    %32 = vst.msk [vmem:[%s31] ss:$12 sm:$0x3] %vm30, %v29
    %v33 = vld [vmem:[#allocation0] sm:$0x3]
    %34 = vrot.lane.b32.xlu0 %v33, 123
    %v35 = vpop.permute.xlu0 %34
    %vm36 = vcmask 7168
    %s37 = scalar_lea.vmem %s1, 5
    %38 = vst.msk [vmem:[%s37] ss:$12 sm:$0x3] %vm36, %v35
    %v39 = vld [vmem:[#allocation0] sm:$0x3]
    %40 = vrot.lane.b32.xlu0 %v39, 122
    %v41 = vpop.permute.xlu0 %40
    %vm42 = vcmask 7168
    %s43 = scalar_lea.vmem %s1, 6
    %44 = vst.msk [vmem:[%s43] ss:$12 sm:$0x3] %vm42, %v41
    %v45 = vld [vmem:[#allocation0] sm:$0x3]
    %46 = vrot.lane.b32.xlu0 %v45, 121
    %v47 = vpop.permute.xlu0 %46
    %vm48 = vcmask 7168
    %s49 = scalar_lea.vmem %s1, 7
    %50 = vst.msk [vmem:[%s49] ss:$12 sm:$0x3] %vm48, %v47
    %v51 = vld [vmem:[#allocation0] sm:$0x3]
    %52 = vrot.lane.b32.xlu0 %v51, 120
    %v53 = vpop.permute.xlu0 %52
    %vm54 = vcmask 7168
    %s55 = scalar_lea.vmem %s1, 8
    %56 = vst.msk [vmem:[%s55] ss:$12 sm:$0x3] %vm54, %v53
    %v57 = vld [vmem:[#allocation0] sm:$0x3]
    %58 = vrot.lane.b32.xlu0 %v57, 119
    %v59 = vpop.permute.xlu0 %58
    %vm60 = vcmask 7168
    %s61 = scalar_lea.vmem %s1, 9
    %62 = vst.msk [vmem:[%s61] ss:$12 sm:$0x3] %vm60, %v59
    %v63 = vld [vmem:[#allocation0] sm:$0x3]
    %64 = vrot.lane.b32.xlu0 %v63, 118
    %v65 = vpop.permute.xlu0 %64
    %vm66 = vcmask 7168
    %s67 = scalar_lea.vmem %s1, 10
    %68 = vst.msk [vmem:[%s67] ss:$12 sm:$0x3] %vm66, %v65
    %v69 = vld [vmem:[#allocation0] sm:$0x3]
    %70 = vrot.lane.b32.xlu0 %v69, 117
    %v71 = vpop.permute.xlu0 %70
    %vm72 = vcmask 7168
    %s73 = scalar_lea.vmem %s1, 11
    %74 = vst.msk [vmem:[%s73] ss:$12 sm:$0x3] %vm72, %v71

// kernel: _lambda_.14
$region0: #{_lambda_.14}
  #allocation0 [shape = 'u32[]', space=smem, size = 0x4, offset = 0x4, fixed_abs, tag = 'smem constant byte address 0x4 - core index']
  #allocation1 [shape = 'u32[144,128]{1,0:T(1,128)}', space=vmem, size = 0x12000, scoped, tag = 'internal scratch']
  %s0 = inlined_call_operand.vmem [shape: bf16[2,2,24,162], index: 0, kind: input, shape index: {}]
  %s1 = inlined_call_operand.vmem [shape: bf16[12,216], index: 1, kind: input, shape index: {}]
  %s2 = inlined_call_operand.vmem [shape: bf16[2,12,256], index: 2, kind: output, shape index: {0}]
  %s3 = inlined_call_operand.vmem [shape: f32[2,2,12,2], index: 3, kind: output, shape index: {1}]
  %4 = xla_tuple %s2, %s3
  %s5 = sld [smem:[#allocation0]]
  $region86: #{_lambda_.14} parent=0
    _
  %s7 = ssub.s32 1, %s5
  %s8 = scalar_select 0, %s7, %s5
  $region1: #{_lambda_.14} parent=0
    #allocation2 [shape = 'u8[8192]{0}', space=vmem, size = 0x2000, scoped, tag = 'output window, operand 0']
    loop: start=0, step=1, limit=6
    $region2: #{_lambda_.14} parent=1 // loop_pre_header
      _
    $region3: #{_lambda_.14} parent=1 // loop_header
      %s10 = sphi 0, %s14
      %p11 = scmp.ge.s32.totalorder %s10, 6
      %s17 = sphi 0, %s29
      %s18 = sphi 0, %s25
      %s19 = sphi 0, %s17
      %s20 = sphi 0, %s18
      %s21 = sphi 0, %s19
      %s22 = sphi 0, %s20
      %s34 = sphi 0, %s36
      %s37 = sphi 0, %s34
      %s38 = sphi 0, %s37
      %s54 = sphi 0, %s38
      %s58 = sphi 0, %s58
      %s60 = sphi 0, %s58
      %s61 = sphi 0, %s60
      %s75 = sphi 0, %s61
      %s83 = sphi 0, %s85
      %s86 = sphi 0, %s83
      %s87 = sphi 0, %s86
      %s103 = sphi 0, %s87
      %s111 = sphi 0, %s113
      %s114 = sphi 0, %s111
      %s115 = sphi 0, %s114
      %s131 = sphi 0, %s115
    $region4: #{_lambda_.14} parent=1 // loop_header_branch
      %13 = sbr.rel (%p11) target = $region8
    $region5: #{_lambda_.14} parent=1 // loop_body
      %s15 = ssub.s32 %s10, 1
      %s16 = ssub.s32 %s10, 2
      %s23 = sadd.s32 1, %s18
      %p24 = scmp.ge.s32.totalorder %s23, 2
      %s25 = scalar_select %p24, 0, %s23
      %s26 = sadd.s32 1, %s17
      %s27 = scalar_select %p24, %s26, %s17
      %p28 = scmp.ge.s32.totalorder %s27, 2
      %s29 = scalar_select %p28, 0, %s27
      %s30 = ssub.s32 %s17, %s29
      %s31 = ssub.s32 %s18, %s25
      %s32 = sor.u32 %s30, %s31
      %p33 = scmp.eq.s32.totalorder %s32, 0
      %s35 = sadd.s32 %s34, 1
      %s36 = scalar_select %p33, %s34, %s35
      %p39 = pneg %p33
      %p40 = scmp.eq.s32.totalorder %s10, 3
      %p41 = por %p39, %p40
      %p42 = scmp.ne.s32.totalorder %s34, %s37
      %p43 = scmp.eq.s32.totalorder %s10, 0
      %p44 = por %p42, %p43
      %p45 = scmp.ne.s32.totalorder %s34, %s37
      %p46 = scmp.eq.s32.totalorder %s15, 3
      %p47 = por %p45, %p46
      %p48 = scmp.ne.s32.totalorder %s37, %s38
      %p49 = scmp.eq.s32.totalorder %s15, 0
      %p50 = por %p48, %p49
      %p51 = scmp.ne.s32.totalorder %s37, %s38
      %p52 = scmp.eq.s32.totalorder %s16, 3
      %p53 = por %p51, %p52
      %p55 = scmp.ne.s32.totalorder %s38, %s54
      %p56 = scmp.eq.s32.totalorder %s16, 0
      %p57 = por %p55, %p56
      %s59 = sadd.s32 %s58, 1
      %p62 = scmp.eq.s32.totalorder %s10, 3
      %p63 = scmp.ne.s32.totalorder %s58, %s60
      %p64 = scmp.eq.s32.totalorder %s10, 0
      %p65 = por %p63, %p64
      %p66 = scmp.ne.s32.totalorder %s58, %s60
      %p67 = scmp.eq.s32.totalorder %s15, 3
      %p68 = por %p66, %p67
      %p69 = scmp.ne.s32.totalorder %s60, %s61
      %p70 = scmp.eq.s32.totalorder %s15, 0
      %p71 = por %p69, %p70
      %p72 = scmp.ne.s32.totalorder %s60, %s61
      %p73 = scmp.eq.s32.totalorder %s16, 3
      %p74 = por %p72, %p73
      %p76 = scmp.ne.s32.totalorder %s61, %s75
      %p77 = scmp.eq.s32.totalorder %s16, 0
      %p78 = por %p76, %p77
      %s79 = ssub.s32 %s17, %s29
      %s80 = ssub.s32 %s18, %s25
      %s81 = sor.u32 %s79, %s80
      %p82 = scmp.eq.s32.totalorder %s81, 0
      %s84 = sadd.s32 %s83, 1
      %s85 = scalar_select %p82, %s83, %s84
      %p88 = pneg %p82
      %p89 = scmp.eq.s32.totalorder %s10, 3
      %p90 = por %p88, %p89
      %p91 = scmp.ne.s32.totalorder %s83, %s86
      %p92 = scmp.eq.s32.totalorder %s10, 0
      %p93 = por %p91, %p92
      %p94 = scmp.ne.s32.totalorder %s83, %s86
      %p95 = scmp.eq.s32.totalorder %s15, 3
      %p96 = por %p94, %p95
      %p97 = scmp.ne.s32.totalorder %s86, %s87
      %p98 = scmp.eq.s32.totalorder %s15, 0
      %p99 = por %p97, %p98
      %p100 = scmp.ne.s32.totalorder %s86, %s87
      %p101 = scmp.eq.s32.totalorder %s16, 3
      %p102 = por %p100, %p101
      %p104 = scmp.ne.s32.totalorder %s87, %s103
      %p105 = scmp.eq.s32.totalorder %s16, 0
      %p106 = por %p104, %p105
      %s107 = ssub.s32 %s17, %s29
      %s108 = ssub.s32 %s18, %s25
      %s109 = sor.u32 %s107, %s108
      %p110 = scmp.eq.s32.totalorder %s109, 0
      %s112 = sadd.s32 %s111, 1
      %s113 = scalar_select %p110, %s111, %s112
      %p116 = pneg %p110
      %p117 = scmp.eq.s32.totalorder %s10, 3
      %p118 = por %p116, %p117
      %p119 = scmp.ne.s32.totalorder %s111, %s114
      %p120 = scmp.eq.s32.totalorder %s10, 0
      %p121 = por %p119, %p120
      %p122 = scmp.ne.s32.totalorder %s111, %s114
      %p123 = scmp.eq.s32.totalorder %s15, 3
      %p124 = por %p122, %p123
      %p125 = scmp.ne.s32.totalorder %s114, %s115
      %p126 = scmp.eq.s32.totalorder %s15, 0
      %p127 = por %p125, %p126
      %p128 = scmp.ne.s32.totalorder %s114, %s115
      %p129 = scmp.eq.s32.totalorder %s16, 3
      %p130 = por %p128, %p129
      %p132 = scmp.ne.s32.totalorder %s115, %s131
      %p133 = scmp.eq.s32.totalorder %s16, 0
      %p134 = por %p132, %p133
      %p135 = scmp.le.s32.totalorder 1, %s10
      %p136 = scmp.lt.s32.totalorder %s10, 5
      %p137 = pnand %p135, %p136
      %p138 = pneg %p137
      // Predicated region
      $region9: #{_lambda_.14} parent=5 // pred_check
        _
      $region10: #{_lambda_.14} parent=5 // pred_check_branch
        %140 = sbr.rel (%p137) target = $region12
      $region11: #{_lambda_.14} parent=5 // pred_region
        %s141 = ssub.s32 %s10, 1
        // Predicated region
        $region13: #{_lambda_.14} parent=11 // pred_check
          %p142 = pneg %p71
        $region14: #{_lambda_.14} parent=11 // pred_check_branch
          %144 = sbr.rel (%p142) target = $region16
        $region15: #{_lambda_.14} parent=11 // pred_region
          _
        $region16: #{_lambda_.14} parent=11 // pred_fallthru
          _
      $region12: #{_lambda_.14} parent=5 // pred_fallthru
        _
      %p145 = scmp.lt.s32.totalorder %s10, 4
      // Predicated region
      $region17: #{_lambda_.14} parent=5 // pred_check
        %p146 = pneg %p145
      $region18: #{_lambda_.14} parent=5 // pred_check_branch
        %148 = sbr.rel (%p146) target = $region20
      $region19: #{_lambda_.14} parent=5 // pred_region
        // Predicated region
        $region21: #{_lambda_.14} parent=19 // pred_check
          %p149 = pneg %p44
        $region22: #{_lambda_.14} parent=19 // pred_check_branch
          %151 = sbr.rel (%p149) target = $region24
        $region23: #{_lambda_.14} parent=19 // pred_region
          %p152 = scmp.lt.s32.totalorder %s17, 1
          %s153 = scalar_select %p152, %s17, 1
          %p154 = scmp.lt.s32.totalorder %s18, 1
          %s155 = scalar_select %p154, %s18, 1
          %s156 = smul.addr %s155, 6
          %s157 = smul.addr %s153, 12
          %s158 = sadd.s32 %s156, %s157
          %s159 = smul.addr %s158, 4
          %s160 = scalar_lea.vmem %s0, %s159
        $region24: #{_lambda_.14} parent=19 // pred_fallthru
          _
      $region20: #{_lambda_.14} parent=5 // pred_fallthru
        _
      %p161 = scmp.le.s32.totalorder 1, %s10
      %p162 = scmp.lt.s32.totalorder %s10, 5
      %p163 = pnand %p161, %p162
      %p164 = pneg %p163
      // Predicated region
      $region25: #{_lambda_.14} parent=5 // pred_check
        _
      $region26: #{_lambda_.14} parent=5 // pred_check_branch
        %166 = sbr.rel (%p163) target = $region28
      $region27: #{_lambda_.14} parent=5 // pred_region
        %s167 = ssub.s32 %s10, 1
        %p168 = scmp.lt.s32.totalorder %s19, 1
        %s169 = scalar_select %p168, %s19, 1
        %p170 = scmp.lt.s32.totalorder %s20, 1
        %s171 = scalar_select %p170, %s20, 1
        %s172 = smul.addr %s171, 6
        %s173 = smul.addr %s169, 12
        %s174 = sadd.s32 %s172, %s173
        %s175 = smul.addr %s174, 4
        %s176 = scalar_lea.vmem %s0, %s175
        %p177 = pneg %p50
        %p178 = pneg %p47
        %p179 = pneg %p71
        %p180 = pneg %p68
        %p181 = pneg %p99
        %p182 = pneg %p96
        %s183 = sand.u32 %s86, 1
        %s184 = sand.u32 %s86, 1
        %s185 = smul.addr %s184, 8
        %s186 = scalar_lea.vmem [#allocation2], %s185
        %p187 = pneg %p127
        %p188 = pneg %p124
        %p189 = scmp.lt.s32.totalorder %s19, 1
        %s190 = scalar_select %p189, %s19, 1
        %p191 = scmp.lt.s32.totalorder %s20, 1
        %s192 = scalar_select %p191, %s20, 1
        %s193 = smul.addr %s192, 2
        %s194 = smul.addr %s190, 4
        %s195 = sadd.s32 %s193, %s194
        %s196 = smul.addr %s195, 8
        %s197 = scalar_lea.vmem %s3, %s196
        %p198 = scmp.lt.s32.totalorder %s19, 1
        %s199 = scalar_select %p198, %s19, 1
        %p200 = scmp.lt.s32.totalorder %s20, 1
        %s201 = scalar_select %p200, %s20, 1
        %s202 = smul.addr %s201, 6
        %s203 = smul.addr %s199, 12
        %s204 = sadd.s32 %s202, %s203
        %s205 = smul.addr %s204, 4
        %s206 = scalar_lea.vmem %s0, %s205
        %p207 = scmp.lt.s32.totalorder %s19, 1
        %s208 = scalar_select %p207, %s19, 1
        %p209 = scmp.lt.s32.totalorder %s20, 1
        %s210 = scalar_select %p209, %s20, 1
        %s211 = smul.addr %s210, 2
        %s212 = smul.addr %s208, 4
        %s213 = sadd.s32 %s211, %s212
        %s214 = smul.addr %s213, 8
        %s215 = scalar_lea.vmem %s3, %s214
        %v219 = vld [vmem:[%s206] sm:$0xff]
        %v220 = vld [vmem:[%s206 + $0x8] sm:$0xff]
        %v221 = vld [vmem:[%s206 + $0x10] sm:$0xff]
        %v222 = vlaneseq
        %v223 = vand.u32 %v222, 127
        %vm224 = vcmp.lt.s32.totalorder %v223, 0
        %v225 = vsub.s32 0, %v223
        %v226 = vsel %vm224, %v225, %v223
        %v227 = vshrl.u32 %v226, 4
        %v228 = vand.u32 %v226, 15
        %v229 = vsub.s32 0, %v228
        %v230 = vsel %vm224, %v229, %v228
        %vm231 = vcmp.ne.s32.totalorder %v230, 0
        %vm232 = vcmp.lt.s32.totalorder %v230, 0
        %vm233 = vmand %vm232, %vm231
        %v234 = vadd.s32 %v230, 16
        %v235 = vsel %vm233, %v234, %v230
        %vm236 = vcmp.ne.s32.totalorder %v235, 0
        %vm237 = vcmp.ne.s32.totalorder %v235, 15
        %v238 = vsel %vm236, 1, 0
        %vm239 = vcmp.eq.s32.totalorder %v238, 1
        %vm240 = vmpackc.low %vm239, %vm239
        %v241 = vsel %vm240, %v219, 0
        %v242 = vsel %vm240, %v220, 0
        %v243 = vsel %vm240, %v221, 0
        %v244 = vsel %vm237, 1, 0
        %vm245 = vcmp.eq.s32.totalorder %v244, 1
        %vm246 = vmpackc.low %vm245, %vm245
        %v247 = vsel %vm246, 65537, 0
        %248 = vrot.lane.b32.xlu0 %v247, 2
        %v249 = vpop.permute.xlu0 %248
        %v250 = vrot.slane %v249, 4
        %vm251 = vcmask 15360
        %v252 = vsel %vm251, %v250, %v249
        %vm253 = vcmp.ne.s16.totalorder %v252, 0
        %v254 = vsel %vm253, %v219, 0
        %v255 = vsel %vm253, %v220, 0
        %v256 = vsel %vm253, %v221, 0
        %v257 = vsel %vm240, 65537, 0
        %258 = vrot.lane.b32.xlu0 %v257, 16
        %v259 = vpop.permute.xlu0 %258
        %v260 = vrot.slane %v259, 4
        %vm261 = vcmask 130048
        %v262 = vsel %vm261, %v260, %v259
        %vm263 = vcmp.ne.s16.totalorder %v262, 0
        %v264 = vsel %vm263, %v219, 0
        %v265 = vsel %vm263, %v220, 0
        %v266 = vsel %vm263, %v221, 0
        %267 = vrot.lane.b32.xlu0 %v247, 18
        %v268 = vpop.permute.xlu0 %267
        %v269 = vrot.slane %v268, 4
        %vm270 = vcmask 146432
        %v271 = vsel %vm270, %v269, %v268
        %vm272 = vcmp.ne.s16.totalorder %v271, 0
        %v273 = vsel %vm272, %v219, 0
        %v274 = vsel %vm272, %v220, 0
        %v275 = vsel %vm272, %v221, 0
        %276 = vrot.lane.b32.xlu0 %v257, 32
        %v277 = vpop.permute.xlu0 %276
        %v278 = vrot.slane %v277, 4
        %vm279 = vcmask 261120
        %v280 = vsel %vm279, %v278, %v277
        %vm281 = vcmp.ne.s16.totalorder %v280, 0
        %v282 = vsel %vm281, %v219, 0
        %v283 = vsel %vm281, %v220, 0
        %v284 = vsel %vm281, %v221, 0
        %285 = vrot.lane.b32.xlu0 %v247, 34
        %v286 = vpop.permute.xlu0 %285
        %v287 = vrot.slane %v286, 4
        %vm288 = vcmask 277504
        %v289 = vsel %vm288, %v287, %v286
        %vm290 = vcmp.ne.s16.totalorder %v289, 0
        %v291 = vsel %vm290, %v219, 0
        %v292 = vsel %vm290, %v220, 0
        %v293 = vsel %vm290, %v221, 0
        %v297 = vunpack.c.l.b16 %v241
        %v298 = vunpack.c.l.b16 %v242
        %v299 = vunpack.c.l.b16 %v243
        %v300 = vpack.c.b16 %v298, %v297
        %v301 = vpack.c.b16 %v299, %v299
        %v306 = vunpack.c.l.b16 %v219
        %v307 = vunpack.c.h.b16 %v219
        %v308 = vunpack.c.l.b16 %v220
        %v309 = vunpack.c.h.b16 %v220
        %v310 = vunpack.c.l.b16 %v221
        %v311 = vunpack.c.h.b16 %v221
        %v312 = vpack.c.b16 %v306, %v306
        %v313 = vpack.c.b16 %v307, %v307
        %v314 = vpack.c.b16 %v310, %v308
        %v315 = vpack.c.b16 %v311, %v309
        %316 = vrot.lane.b32.xlu0 %v312, 127
        %v317 = vpop.permute.xlu0 %316
        %318 = vrot.lane.b32.xlu0 %v313, 127
        %v319 = vpop.permute.xlu0 %318
        %320 = vrot.lane.b32.xlu0 %v314, 127
        %v321 = vpop.permute.xlu0 %320
        %322 = vrot.lane.b32.xlu0 %v315, 127
        %v323 = vpop.permute.xlu0 %322
        %vm324 = vcmask 1039360
        %v325 = vsel %vm324, %v317, %v319
        %v326 = vsel %vm324, %v321, %v323
        %v331 = vunpack.c.l.b16 %v254
        %v332 = vunpack.c.h.b16 %v254
        %v333 = vunpack.c.l.b16 %v255
        %v334 = vunpack.c.h.b16 %v255
        %v335 = vunpack.c.l.b16 %v256
        %v336 = vunpack.c.h.b16 %v256
        %v337 = vpack.c.b16 %v333, %v331
        %v338 = vpack.c.b16 %v334, %v332
        %v339 = vpack.c.b16 %v335, %v335
        %v340 = vpack.c.b16 %v336, %v336
        %341 = vrot.lane.b32.xlu0 %v337, 126
        %v342 = vpop.permute.xlu0 %341
        %343 = vrot.lane.b32.xlu0 %v338, 126
        %v344 = vpop.permute.xlu0 %343
        %345 = vrot.lane.b32.xlu0 %v339, 126
        %v346 = vpop.permute.xlu0 %345
        %347 = vrot.lane.b32.xlu0 %v340, 126
        %v348 = vpop.permute.xlu0 %347
        %vm349 = vcmask 1031168
        %v350 = vsel %vm349, %v342, %v344
        %v351 = vsel %vm349, %v346, %v348
        %v356 = vunpack.c.l.b16 %v264
        %v357 = vunpack.c.h.b16 %v264
        %v358 = vunpack.c.l.b16 %v265
        %v359 = vunpack.c.h.b16 %v265
        %v360 = vunpack.c.l.b16 %v266
        %v361 = vunpack.c.h.b16 %v266
        %v362 = vpack.c.b16 %v356, %v356
        %v363 = vpack.c.b16 %v357, %v357
        %v364 = vpack.c.b16 %v360, %v358
        %v365 = vpack.c.b16 %v361, %v359
        %366 = vrot.lane.b32.xlu0 %v362, 112
        %v367 = vpop.permute.xlu0 %366
        %368 = vrot.lane.b32.xlu0 %v363, 112
        %v369 = vpop.permute.xlu0 %368
        %370 = vrot.lane.b32.xlu0 %v364, 112
        %v371 = vpop.permute.xlu0 %370
        %372 = vrot.lane.b32.xlu0 %v365, 112
        %v373 = vpop.permute.xlu0 %372
        %vm374 = vcmask 916480
        %v375 = vsel %vm374, %v367, %v369
        %v376 = vsel %vm374, %v371, %v373
        %v378 = vpack.c.b16 %v308, %v306
        %v379 = vpack.c.b16 %v309, %v307
        %v380 = vpack.c.b16 %v310, %v310
        %v381 = vpack.c.b16 %v311, %v311
        %382 = vrot.lane.b32.xlu0 %v378, 111
        %v383 = vpop.permute.xlu0 %382
        %384 = vrot.lane.b32.xlu0 %v379, 111
        %v385 = vpop.permute.xlu0 %384
        %386 = vrot.lane.b32.xlu0 %v380, 111
        %v387 = vpop.permute.xlu0 %386
        %388 = vrot.lane.b32.xlu0 %v381, 111
        %v389 = vpop.permute.xlu0 %388
        %vm390 = vcmask 908288
        %v391 = vsel %vm390, %v383, %v385
        %v392 = vsel %vm390, %v387, %v389
        %v397 = vunpack.c.l.b16 %v273
        %v398 = vunpack.c.h.b16 %v273
        %v399 = vunpack.c.l.b16 %v274
        %v400 = vunpack.c.h.b16 %v274
        %v401 = vunpack.c.l.b16 %v275
        %v402 = vunpack.c.h.b16 %v275
        %v403 = vpack.c.b16 %v397, %v397
        %v404 = vpack.c.b16 %v398, %v398
        %v405 = vpack.c.b16 %v401, %v399
        %v406 = vpack.c.b16 %v402, %v400
        %407 = vrot.lane.b32.xlu0 %v403, 110
        %v408 = vpop.permute.xlu0 %407
        %409 = vrot.lane.b32.xlu0 %v404, 110
        %v410 = vpop.permute.xlu0 %409
        %411 = vrot.lane.b32.xlu0 %v405, 110
        %v412 = vpop.permute.xlu0 %411
        %413 = vrot.lane.b32.xlu0 %v406, 110
        %v414 = vpop.permute.xlu0 %413
        %vm415 = vcmask 900096
        %v416 = vsel %vm415, %v408, %v410
        %v417 = vsel %vm415, %v412, %v414
        %v422 = vunpack.c.l.b16 %v282
        %v423 = vunpack.c.h.b16 %v282
        %v424 = vunpack.c.l.b16 %v283
        %v425 = vunpack.c.h.b16 %v283
        %v426 = vunpack.c.l.b16 %v284
        %v427 = vunpack.c.h.b16 %v284
        %v428 = vpack.c.b16 %v424, %v422
        %v429 = vpack.c.b16 %v425, %v423
        %v430 = vpack.c.b16 %v426, %v426
        %v431 = vpack.c.b16 %v427, %v427
        %432 = vrot.lane.b32.xlu0 %v428, 96
        %v433 = vpop.permute.xlu0 %432
        %434 = vrot.lane.b32.xlu0 %v429, 96
        %v435 = vpop.permute.xlu0 %434
        %436 = vrot.lane.b32.xlu0 %v430, 96
        %v437 = vpop.permute.xlu0 %436
        %438 = vrot.lane.b32.xlu0 %v431, 96
        %v439 = vpop.permute.xlu0 %438
        %vm440 = vcmask 785408
        %v441 = vsel %vm440, %v433, %v435
        %v442 = vsel %vm440, %v437, %v439
        %444 = vrot.lane.b32.xlu0 %v312, 95
        %v445 = vpop.permute.xlu0 %444
        %446 = vrot.lane.b32.xlu0 %v313, 95
        %v447 = vpop.permute.xlu0 %446
        %448 = vrot.lane.b32.xlu0 %v314, 95
        %v449 = vpop.permute.xlu0 %448
        %450 = vrot.lane.b32.xlu0 %v315, 95
        %v451 = vpop.permute.xlu0 %450
        %vm452 = vcmask 777216
        %v453 = vsel %vm452, %v445, %v447
        %v454 = vsel %vm452, %v449, %v451
        %v459 = vunpack.c.l.b16 %v291
        %v460 = vunpack.c.h.b16 %v291
        %v461 = vunpack.c.l.b16 %v292
        %v462 = vunpack.c.h.b16 %v292
        %v463 = vunpack.c.l.b16 %v293
        %v464 = vunpack.c.h.b16 %v293
        %v465 = vpack.c.b16 %v461, %v459
        %v466 = vpack.c.b16 %v462, %v460
        %v467 = vpack.c.b16 %v463, %v463
        %v468 = vpack.c.b16 %v464, %v464
        %469 = vrot.lane.b32.xlu0 %v465, 94
        %v470 = vpop.permute.xlu0 %469
        %471 = vrot.lane.b32.xlu0 %v466, 94
        %v472 = vpop.permute.xlu0 %471
        %473 = vrot.lane.b32.xlu0 %v467, 94
        %v474 = vpop.permute.xlu0 %473
        %475 = vrot.lane.b32.xlu0 %v468, 94
        %v476 = vpop.permute.xlu0 %475
        %vm477 = vcmask 769024
        %v478 = vsel %vm477, %v470, %v472
        %v479 = vsel %vm477, %v474, %v476
        %vm481 = vcmask 1043456
        %v484 = vsel %vm481, %v301, %v325
        %v488 = vsel %vm481, %v351, %v375
        %v492 = vsel %vm481, %v392, %v416
        %v496 = vsel %vm481, %v442, %v453
        %v498 = vld [vmem:[%s1] sm:$0xff]
        %v499 = vld [vmem:[%s1 + $0x8] sm:$0x33]
        %v502 = vunpack.c.l.b16 %v498
        %v503 = vunpack.c.h.b16 %v498
        %v504 = vunpack.c.l.b16 %v499
        %v505 = vunpack.c.h.b16 %v499
        %v506 = vpack.c.b16 %v504, %v502
        %v507 = vpack.c.b16 %v505, %v503
        %vm509 = vcmask 719872
        %v511 = vsel %vm509, %v507, 0
        %v514 = vsel %vm481, %v479, 0
        %516 = vmatprep.subr.bf16.mxu0 0
        %517 = vmatpush1.bf16.msra.mxu0 %v300
        %518 = vmatprep.subr.bf16.mxu0 0
        %519 = vmatpush1.bf16.msra.mxu0 %v484
        %520 = vmatprep.subr.bf16.mxu0 0
        %521 = vmatpush1.bf16.msra.mxu0 %v326
        %522 = vmatprep.subr.bf16.mxu0 0
        %523 = vmatpush1.bf16.msra.mxu0 %v350
        %524 = vmatprep.subr.bf16.mxu0 0
        %525 = vmatpush1.bf16.msra.mxu0 %v488
        %526 = vmatprep.subr.bf16.mxu0 0
        %527 = vmatpush1.bf16.msra.mxu0 %v376
        %528 = vmatprep.subr.bf16.mxu0 0
        %529 = vmatpush1.bf16.msra.mxu0 %v391
        %530 = vmatprep.subr.bf16.mxu0 0
        %531 = vmatpush1.bf16.msra.mxu0 %v492
        %532 = vmatprep.subr.bf16.mxu0 0
        %533 = vmatpush1.bf16.msra.mxu0 %v417
        %534 = vmatprep.subr.bf16.mxu0 0
        %535 = vmatpush1.bf16.msra.mxu0 %v441
        %536 = vmatprep.subr.bf16.mxu0 0
        %537 = vmatpush1.bf16.msra.mxu0 %v496
        %538 = vmatprep.subr.bf16.mxu0 0
        %539 = vmatpush1.bf16.msra.mxu0 %v454
        %540 = vmatprep.subr.bf16.mxu0 0
        %541 = vmatpush1.bf16.msra.mxu0 %v478
        %542 = vmatprep.subr.bf16.mxu0 0
        %543 = vmatpush1.bf16.msra.mxu0 %v514
        %544 = vmatprep.subr.bf16.mxu0 0
        %545 = vmatpush1.bf16.msra.mxu0 0
        %546 = vmatprep.subr.bf16.mxu0 0
        %547 = vmatpush1.bf16.msra.mxu0 0
        %548 = vmatprep.mubr.bf16.mxu0 %v511
        %549 = vmatmul.mubr.bf16.gmra.mrb[0].mxu0 %v506
        %v550 = vpop.f32.mrb[0].mxu0
        %v551 = vadd.f32 0.0, %v550
        %v552 = vpop.f32.mrb[0].mxu0
        %v553 = vpop.f32.mrb[0].mxu0
        %v554 = vadd.f32 0.0, %v553
        %v555 = vpop.f32.mrb[0].mxu0
        %556 = vdwg.mxu0
        %557 = vadd.xlane.f32.xlu0 %v551
        %v558 = vpop.xlane.xlu0 %557
        %v559 = vsel %vm481, %v554, 0.0
        %560 = vadd.xlane.f32.xlu0 %v559
        %v561 = vpop.xlane.xlu0 %560
        %v562 = vmul.f32 %v551, %v551
        %v563 = vmul.f32 %v554, %v554
        %564 = vadd.xlane.f32.xlu0 %v562
        %v565 = vpop.xlane.xlu0 %564
        %v566 = vsel %vm481, %v563, 0.0
        %567 = vadd.xlane.f32.xlu0 %v566
        %v568 = vpop.xlane.xlu0 %567
        %vm569 = vcmask 7168
        %v570 = vsel %vm569, %v558, %v565
        %v571 = vsel %vm569, %v561, %v568
        %vm572 = vcmask 15360
        %573 = vst.msk [vmem:[%s215] sm:$0xff] %vm572, %v570
        %vm574 = vcmask 11264
        %575 = vst.msk [vmem:[%s215 + $0x8] sm:$0xf] %vm574, %v571
        %v576 = vpack.c.bf16 %v554, %v551
        %v578 = vunpack.c.l.b16 %v576
        %v579 = vunpack.c.h.b16 %v576
        %v580 = vpack.c.b16 %v578, %v578
        %v581 = vpack.c.b16 %v579, %v579
        %584 = vst [vmem:[%s186] sm:$0xf] %v580
        %585 = vst [vmem:[%s186 + $0x4] sm:$0x3] %v581
        %s586 = sand.u32 %s86, 1
        %s587 = sand.u32 %s86, 1
        %s588 = smul.addr %s587, 8
        %s589 = scalar_lea.vmem [#allocation2], %s588
        %p590 = scmp.lt.s32.totalorder %s19, 1
        %s591 = scalar_select %p590, %s19, 1
        %p592 = scmp.lt.s32.totalorder %s20, 1
        %s593 = scalar_select %p592, %s20, 1
        %s594 = smul.addr %s593, 2
        %s595 = smul.addr %s591, 4
        %s596 = sadd.s32 %s594, %s595
        %s597 = smul.addr %s596, 8
        %s598 = scalar_lea.vmem %s3, %s597
        // Predicated region
        $region29: #{_lambda_.14} parent=27 // pred_check
          %p599 = pneg %p96
        $region30: #{_lambda_.14} parent=27 // pred_check_branch
          %601 = sbr.rel (%p599) target = $region32
        $region31: #{_lambda_.14} parent=27 // pred_region
          %s602 = smul.addr %s19, 4
          %s603 = sadd.s32 %s20, %s602
          %s604 = smul.addr %s603, 4
          %s605 = scalar_lea.vmem %s2, %s604
          // Predicated region
          $region33: #{_lambda_.14} parent=31 // pred_check
            _
          $region34: #{_lambda_.14} parent=31 // pred_check_branch
            %607 = sbr.rel (0) target = $region36
          $region35: #{_lambda_.14} parent=31 // pred_region
            // Predicated region
            $region37: #{_lambda_.14} parent=35 // pred_check
              _
            $region38: #{_lambda_.14} parent=35 // pred_check_branch
              %609 = sbr.rel target = $region40
            $region39: #{_lambda_.14} parent=35 // pred_region
              // Predicated region
              $region52: #{_lambda_.14} parent=39 // pred_check
                _
              $region53: #{_lambda_.14} parent=39 // pred_check_branch
                %626 = sbr.rel (0) target = $region55
              $region54: #{_lambda_.14} parent=39 // pred_region
                loop: start=0, step=1, limit=1
                $region56: #{_lambda_.14} parent=54 // loop_pre_header
                  _
                $region57: #{_lambda_.14} parent=54 // loop_header
                  %s628 = sphi 0, %s632
                  %p629 = scmp.ge.s32.totalorder %s628, 1
                  %s633 = sphi %s589, %s589
                  %s634 = sphi %s605, %s605
                $region58: #{_lambda_.14} parent=54 // loop_header_branch
                  %631 = sbr.rel (%p629) target = $region62
                $region59: #{_lambda_.14} parent=54 // loop_body
                  _
                $region60: #{_lambda_.14} parent=54 // loop_footer
                  %s632 = sadd.s32 1, %s628
                $region61: #{_lambda_.14} parent=54 // loop_footer_branch
                  %627 = sbr.rel target = $region57
                $region62: #{_lambda_.14} parent=54 // loop_exit
                  _
                loop: start=0, step=1, limit=1
                $region63: #{_lambda_.14} parent=54 // loop_pre_header
                  _
                $region64: #{_lambda_.14} parent=54 // loop_header
                  %s637 = sphi 0, %s641
                  %p638 = scmp.ge.s32.totalorder %s637, 1
                  %s642 = sphi %s589, %s589
                  %s643 = sphi %s605, %s605
                $region65: #{_lambda_.14} parent=54 // loop_header_branch
                  %640 = sbr.rel (%p638) target = $region69
                $region66: #{_lambda_.14} parent=54 // loop_body
                  %v644 = vld [vmem:[%s642] sm:$0xf]
                  %645 = vst [vmem:[%s643] sm:$0xf] %v644
                  %v646 = vld [vmem:[%s642 + $0x4] sm:$0xf]
                  %647 = vst [vmem:[%s643 + $0x8] sm:$0xf] %v646
                $region67: #{_lambda_.14} parent=54 // loop_footer
                  %s641 = sadd.s32 1, %s637
                $region68: #{_lambda_.14} parent=54 // loop_footer_branch
                  %636 = sbr.rel target = $region64
                $region69: #{_lambda_.14} parent=54 // loop_exit
                  _
              $region55: #{_lambda_.14} parent=39 // pred_fallthru
                _
            $region40: #{_lambda_.14} parent=35 // pred_fallthru
              _
            // Predicated region
            $region41: #{_lambda_.14} parent=35 // pred_check
              _
            $region42: #{_lambda_.14} parent=35 // pred_check_branch
              %611 = sbr.rel (0) target = $region44
            $region43: #{_lambda_.14} parent=35 // pred_region
              loop: start=0, step=1, limit=1
              $region45: #{_lambda_.14} parent=43 // loop_pre_header
                _
              $region46: #{_lambda_.14} parent=43 // loop_header
                %s614 = sphi 0, %s618
                %p615 = scmp.ge.s32.totalorder %s614, 1
                %s619 = sphi %s589, %s589
                %s620 = sphi %s605, %s605
              $region47: #{_lambda_.14} parent=43 // loop_header_branch
                %617 = sbr.rel (%p615) target = $region51
              $region48: #{_lambda_.14} parent=43 // loop_body
                %v621 = vld [vmem:[%s619] sm:$0xf]
                %622 = vst [vmem:[%s620] sm:$0xf] %v621
                %v623 = vld [vmem:[%s619 + $0x4] sm:$0xf]
                %624 = vst [vmem:[%s620 + $0x8] sm:$0xf] %v623
              $region49: #{_lambda_.14} parent=43 // loop_footer
                %s618 = sadd.s32 1, %s614
              $region50: #{_lambda_.14} parent=43 // loop_footer_branch
                %613 = sbr.rel target = $region46
              $region51: #{_lambda_.14} parent=43 // loop_exit
                _
            $region44: #{_lambda_.14} parent=35 // pred_fallthru
              _
          $region36: #{_lambda_.14} parent=31 // pred_fallthru
            _
          %648 = vnop
        $region32: #{_lambda_.14} parent=27 // pred_fallthru
          _
        // Predicated region
        $region70: #{_lambda_.14} parent=27 // pred_check
          %p649 = pneg %p124
        $region71: #{_lambda_.14} parent=27 // pred_check_branch
          %651 = sbr.rel (%p649) target = $region73
        $region72: #{_lambda_.14} parent=27 // pred_region
          _
        $region73: #{_lambda_.14} parent=27 // pred_fallthru
          _
      $region28: #{_lambda_.14} parent=5 // pred_fallthru
        _
      %p652 = scmp.le.s32.totalorder 2, %s10
      // Predicated region
      $region74: #{_lambda_.14} parent=5 // pred_check
        %p653 = pneg %p652
      $region75: #{_lambda_.14} parent=5 // pred_check_branch
        %655 = sbr.rel (%p653) target = $region77
      $region76: #{_lambda_.14} parent=5 // pred_region
        %s656 = ssub.s32 %s10, 2
        // Predicated region
        $region78: #{_lambda_.14} parent=76 // pred_check
          %p657 = pneg %p102
        $region79: #{_lambda_.14} parent=76 // pred_check_branch
          %659 = sbr.rel (%p657) target = $region81
        $region80: #{_lambda_.14} parent=76 // pred_region
          %s660 = sand.u32 %s87, 1
          %s661 = sand.u32 %s87, 1
          %s662 = smul.addr %s661, 8
          %s663 = scalar_lea.vmem [#allocation2], %s662
        $region81: #{_lambda_.14} parent=76 // pred_fallthru
          _
        // Predicated region
        $region82: #{_lambda_.14} parent=76 // pred_check
          %p664 = pneg %p130
        $region83: #{_lambda_.14} parent=76 // pred_check_branch
          %666 = sbr.rel (%p664) target = $region85
        $region84: #{_lambda_.14} parent=76 // pred_region
          %p667 = scmp.lt.s32.totalorder %s21, 1
          %s668 = scalar_select %p667, %s21, 1
          %p669 = scmp.lt.s32.totalorder %s22, 1
          %s670 = scalar_select %p669, %s22, 1
          %s671 = smul.addr %s670, 2
          %s672 = smul.addr %s668, 4
          %s673 = sadd.s32 %s671, %s672
          %s674 = smul.addr %s673, 8
          %s675 = scalar_lea.vmem %s3, %s674
        $region85: #{_lambda_.14} parent=76 // pred_fallthru
          _
      $region77: #{_lambda_.14} parent=5 // pred_fallthru
        _
    $region6: #{_lambda_.14} parent=1 // loop_footer
      %s14 = sadd.s32 1, %s10
    $region7: #{_lambda_.14} parent=1 // loop_footer_branch
      %9 = sbr.rel target = $region3
    $region8: #{_lambda_.14} parent=1 // loop_exit
      _

// kernel: _lambda_.15
$region0: #{_lambda_.15}
  #allocation0 [shape = 'u32[]', space=smem, size = 0x4, offset = 0x4, fixed_abs, tag = 'smem constant byte address 0x4 - core index']
  #allocation1 [shape = 'u32[144,128]{1,0:T(1,128)}', space=vmem, size = 0x12000, scoped, tag = 'internal scratch']
  %s0 = inlined_call_operand.vmem [shape: bf16[24,256], index: 0, kind: input, shape index: {}]
  %s1 = inlined_call_operand.vmem [shape: f32[24,1], index: 1, kind: input, shape index: {}]
  %s2 = inlined_call_operand.vmem [shape: f32[24,1], index: 2, kind: input, shape index: {}]
  %s3 = inlined_call_operand.vmem [shape: bf16[24,256], index: 3, kind: output, shape index: {}]
  %s4 = sld [smem:[#allocation0]]
  $region22: #{_lambda_.15} parent=0
    _
  %s6 = ssub.s32 1, %s4
  %s7 = scalar_select 0, %s6, %s4
  // Predicated region
  $region2: #{_lambda_.15} parent=0 // pred_check
    _
  $region3: #{_lambda_.15} parent=0 // pred_check_branch
    %9 = sbr.rel (0) target = $region5
  $region4: #{_lambda_.15} parent=0 // pred_region
    _
  $region5: #{_lambda_.15} parent=0 // pred_fallthru
    _
  // Predicated region
  $region6: #{_lambda_.15} parent=0 // pred_check
    _
  $region7: #{_lambda_.15} parent=0 // pred_check_branch
    %11 = sbr.rel (0) target = $region9
  $region8: #{_lambda_.15} parent=0 // pred_region
    _
  $region9: #{_lambda_.15} parent=0 // pred_fallthru
    _
  // Predicated region
  $region10: #{_lambda_.15} parent=0 // pred_check
    _
  $region11: #{_lambda_.15} parent=0 // pred_check_branch
    %13 = sbr.rel (0) target = $region13
  $region12: #{_lambda_.15} parent=0 // pred_region
    _
  $region13: #{_lambda_.15} parent=0 // pred_fallthru
    _
  %v14 = vld [vmem:[%s0] sm:$0xff]
  %v15 = vld [vmem:[%s0 + $0x8] sm:$0xff]
  %v16 = vld [vmem:[%s0 + $0x10] sm:$0xff]
  %v17 = vunpack.c.l.bf16 %v14
  %v18 = vunpack.c.h.bf16 %v14
  %v19 = vunpack.c.l.bf16 %v15
  %v20 = vunpack.c.h.bf16 %v15
  %v21 = vunpack.c.l.bf16 %v16
  %v22 = vunpack.c.h.bf16 %v16
  %v23 = vld [vmem:[%s1] sm:$0xff]
  %v24 = vld [vmem:[%s1 + $0x8] sm:$0xff]
  %v25 = vld [vmem:[%s1 + $0x10] sm:$0xff]
  %27 = vset.pattern.permute.xlu0 0
  %28 = vperm.xlu0 %27, %v23
  %v29 = vpop.permute.xlu0 %28
  %32 = vset.pattern.permute.xlu0 0
  %33 = vperm.xlu0 %32, %v24
  %v34 = vpop.permute.xlu0 %33
  %37 = vset.pattern.permute.xlu0 0
  %38 = vperm.xlu0 %37, %v25
  %v39 = vpop.permute.xlu0 %38
  %v41 = vmul.f32 %v17, %v29
  %v42 = vmul.f32 %v18, %v29
  %v43 = vmul.f32 %v19, %v34
  %v44 = vmul.f32 %v20, %v34
  %v45 = vmul.f32 %v21, %v39
  %v46 = vmul.f32 %v22, %v39
  %v47 = vld [vmem:[%s2] sm:$0xff]
  %v48 = vld [vmem:[%s2 + $0x8] sm:$0xff]
  %v49 = vld [vmem:[%s2 + $0x10] sm:$0xff]
  %51 = vset.pattern.permute.xlu0 0
  %52 = vperm.xlu0 %51, %v47
  %v53 = vpop.permute.xlu0 %52
  %56 = vset.pattern.permute.xlu0 0
  %57 = vperm.xlu0 %56, %v48
  %v58 = vpop.permute.xlu0 %57
  %61 = vset.pattern.permute.xlu0 0
  %62 = vperm.xlu0 %61, %v49
  %v63 = vpop.permute.xlu0 %62
  %v65 = vadd.f32 %v41, %v53
  %v66 = vadd.f32 %v42, %v53
  %v67 = vadd.f32 %v43, %v58
  %v68 = vadd.f32 %v44, %v58
  %v69 = vadd.f32 %v45, %v63
  %v70 = vadd.f32 %v46, %v63
  %v71 = vmax.f32 %v65, 0.0
  %v72 = vmax.f32 %v66, 0.0
  %v73 = vmax.f32 %v67, 0.0
  %v74 = vmax.f32 %v68, 0.0
  %v75 = vmax.f32 %v69, 0.0
  %v76 = vmax.f32 %v70, 0.0
  %v77 = vpack.c.bf16 %v73, %v71
  %v78 = vpack.c.bf16 %v74, %v72
  %v79 = vpack.c.bf16 %v75, %v75
  %v80 = vpack.c.bf16 %v76, %v76
  %v85 = vunpack.c.l.b16 %v77
  %v86 = vunpack.c.l.b16 %v78
  %v87 = vunpack.c.h.b16 %v77
  %v88 = vunpack.c.h.b16 %v78
  %v89 = vunpack.c.l.b16 %v79
  %v90 = vunpack.c.l.b16 %v80
  %v91 = vpack.c.b16 %v86, %v85
  %v92 = vpack.c.b16 %v88, %v87
  %v93 = vpack.c.b16 %v90, %v89
  %97 = vst [vmem:[%s3] sm:$0xff] %v91
  %98 = vst [vmem:[%s3 + $0x8] sm:$0xff] %v92
  %99 = vst [vmem:[%s3 + $0x10] sm:$0xff] %v93
  // Predicated region
  $region14: #{_lambda_.15} parent=0 // pred_check
    _
  $region15: #{_lambda_.15} parent=0 // pred_check_branch
    %101 = sbr.rel (0) target = $region17
  $region16: #{_lambda_.15} parent=0 // pred_region
    _
  $region17: #{_lambda_.15} parent=0 // pred_fallthru
    _
  // Predicated region
  $region18: #{_lambda_.15} parent=0 // pred_check
    _
  $region19: #{_lambda_.15} parent=0 // pred_check_branch
    %103 = sbr.rel (0) target = $region21
  $region20: #{_lambda_.15} parent=0 // pred_region
    _
  $region21: #{_lambda_.15} parent=0 // pred_fallthru
    _

</llo_original>
